<compile_context>
chip_gen: v7x
topology: tpu7x:2x2x1
jax: 0.10.0
libtpu: 0.0.40
codegen_flags: <defaults>
</compile_context>

<pallas_src>
import jax
import jax.numpy as jnp
from jax.experimental import pallas as pl
from jax.experimental.pallas import tpu as pltpu

EMBED = 8     # embedding_size
HIDDEN = 16   # hidden_size
OUT = 2       # output_size

# Packed-parameter slab layout (P_ROWS x 64 lanes), sublane(8)-aligned blocks:
#   rows  0:2   cols 0:8    linear1 weight^T               (OUT, EMBED)
#   rows  8:16  cols 0:64   i2h weight^T                   (EMBED, 4H)
#   rows 16:32  cols 0:64   h2h weight^T                   (HIDDEN, 4H)
#   rows 32:48  cols 0:2    linear2 weight^T               (HIDDEN, OUT)
#   row  48     cols 0:8    linear1 bias
#   row  49     cols 0:64   i2h bias + h2h bias
#   row  50     cols 0:2    linear2 bias
P_ROWS = 56
P_COLS = 4 * HIDDEN

# Timesteps up to this count are fully unrolled at trace time.
_FULL_UNROLL_T = 64


def _decoder_seq_kernel(x_ref, h0_ref, c0_ref, p_ref,
                        out_ref, hT_ref, cT_ref,
                        xp_ref, hs_ref):
    H = HIDDEN
    TB = x_ref.shape[0]          # T * B   (static)
    B = h0_ref.shape[0]          # batch   (static)
    T = TB // B

    # ---- parameter loads hoisted out of the time loop (once per call) ----
    b1 = p_ref[48:49, 0:EMBED]                        # (1, EMBED)
    wi = p_ref[8:8 + EMBED, :]                        # (EMBED, 4H)
    wh = p_ref[16:16 + HIDDEN, :]                     # (HIDDEN, 4H)
    b_lstm = p_ref[49:50, :]                          # (1, 4H)
    w2 = p_ref[32:48, 0:OUT]                          # (HIDDEN, OUT)
    b2 = p_ref[50:51, 0:OUT]                          # (1, OUT)

    # ---- linear1 + ReLU + i2h for ALL timesteps (no recurrent dependence) ----
    x = x_ref[...]                                    # (T*B, OUT)
    emb = b1
    for k in range(OUT):                              # K=2 -> two VPU FMAs, no MXU
        emb = emb + x[:, k:k + 1] * p_ref[k:k + 1, 0:EMBED]
    emb = jnp.maximum(emb, 0.0)                       # (T*B, EMBED)
    # input-side LSTM pre-activation + fused biases, bulked over all timesteps
    xp_ref[...] = (jnp.dot(emb, wi, preferred_element_type=jnp.float32)
                   + b_lstm)                          # (T*B, 4H)

    # ---- sequential LSTM recurrence: h/c carried as loop values (vregs) ----
    def step(t, carry):
        h, c = carry
        preact = xp_ref[pl.ds(t * B, B), :] + jnp.dot(
            h, wh, preferred_element_type=jnp.float32)        # (B, 4H)
        gates = jax.nn.sigmoid(preact[:, :3 * H])
        g_t = jnp.tanh(preact[:, 3 * H:])
        i_t = gates[:, :H]
        f_t = gates[:, H:2 * H]
        o_t = gates[:, 2 * H:3 * H]
        c_t = c * f_t + i_t * g_t
        h_t = o_t * jnp.tanh(c_t)
        hs_ref[pl.ds(t * B, B), :] = h_t              # stash for bulk linear2
        return h_t, c_t

    carry = (h0_ref[...], c0_ref[...])
    if T <= _FULL_UNROLL_T:
        for t in range(T):                            # fully static unroll
            carry = step(t, carry)
    else:
        carry = jax.lax.fori_loop(0, T, step, carry, unroll=8)
    h_T, c_T = carry

    hT_ref[...] = h_T
    cT_ref[...] = c_T

    # ---- linear2 for ALL timesteps, one bulk matmul + one bulk store ----
    out_ref[...] = (jnp.dot(hs_ref[...], w2, preferred_element_type=jnp.float32)
                    + b2)                             # (T*B, OUT)


def prepare_params(params):
    """One-time packing of PyTorch-convention params into a single VMEM slab.

    Hoisted out of the call path: transposes, bias fusion (bi+bh) and padding
    happen once at parameter-load time.
    """
    w1 = params["linear1.weights"].T                 # (OUT, EMBED)
    b1 = params["linear1.bias"]                      # (EMBED,)
    wi = params["lstm1.i2h.weights"].T               # (EMBED, 4H)
    wh = params["lstm1.h2h.weights"].T               # (HIDDEN, 4H)
    b_lstm = params["lstm1.i2h.bias"] + params["lstm1.h2h.bias"]   # (4H,)
    w2 = params["linear2.weights"].T                 # (HIDDEN, OUT)
    b2 = params["linear2.bias"]                      # (OUT,)

    slab = jnp.zeros((P_ROWS, P_COLS), jnp.float32)
    slab = slab.at[0:OUT, 0:EMBED].set(w1)
    slab = slab.at[8:8 + EMBED, :].set(wi)
    slab = slab.at[16:16 + HIDDEN, :].set(wh)
    slab = slab.at[32:32 + HIDDEN, 0:OUT].set(w2)
    slab = slab.at[48, 0:EMBED].set(b1)
    slab = slab.at[49, :].set(b_lstm)
    slab = slab.at[50, 0:OUT].set(b2)
    return slab


def meta_decoder_rnn_sequence(xs, hidden, param_slab):
    """Run T fused decoder steps in a single pallas_call (single grid step).

    xs: (T, B, OUT) inputs per timestep.  hidden: (h0, c0) each (B, HIDDEN).
    param_slab: output of prepare_params().
    Returns (outputs (T, B, OUT), (h_T, c_T)).
    """
    T, B, _ = xs.shape
    h0, c0 = hidden
    x2 = xs.reshape(T * B, OUT)      # contiguous reshape, free in XLA

    # TODO(synk): for very large T (multi-MB sequences), add a time-chunking
    # grid axis sized for v7x's 64 MiB VMEM; irrelevant at these KB-scale shapes.
    grid_spec = pltpu.PrefetchScalarGridSpec(
        num_scalar_prefetch=0,
        grid=(1,),
        in_specs=[
            # everything resident in VMEM for the whole call
            pl.BlockSpec((T * B, OUT), lambda i: (0, 0)),
            pl.BlockSpec((B, HIDDEN), lambda i: (0, 0)),
            pl.BlockSpec((B, HIDDEN), lambda i: (0, 0)),
            pl.BlockSpec((P_ROWS, P_COLS), lambda i: (0, 0)),
        ],
        out_specs=(
            pl.BlockSpec((T * B, OUT), lambda i: (0, 0)),
            pl.BlockSpec((B, HIDDEN), lambda i: (0, 0)),
            pl.BlockSpec((B, HIDDEN), lambda i: (0, 0)),
        ),
        scratch_shapes=[
            pltpu.VMEM((T * B, 4 * HIDDEN), jnp.float32),   # bulk i2h pre-activations
            pltpu.VMEM((T * B, HIDDEN), jnp.float32),       # per-step hidden states
        ],
    )

    out2, h_t, c_t = pl.pallas_call(
        _decoder_seq_kernel,
        out_shape=(
            jax.ShapeDtypeStruct((T * B, OUT), jnp.float32),
            jax.ShapeDtypeStruct((B, HIDDEN), jnp.float32),
            jax.ShapeDtypeStruct((B, HIDDEN), jnp.float32),
        ),
        grid_spec=grid_spec,
        compiler_params=pltpu.CompilerParams(
            dimension_semantics=("arbitrary",)),
    )(x2, h0, c0, param_slab)
    return out2.reshape(T, B, OUT), (h_t, c_t)


def meta_decoder_rnn(x, hidden, param_slab):
    """Single-step API matching MetaDecoderRNN.forward (T=1 instance of the fused kernel)."""
    out_seq, hidden_t = meta_decoder_rnn_sequence(x[None], hidden, param_slab)
    return out_seq[0], hidden_t


# ----------------------------- pure-JAX reference -----------------------------

def _reference_step(x, hidden, params):
    h, c = hidden
    H = HIDDEN
    emb = jax.nn.relu(x @ params["linear1.weights"].T + params["linear1.bias"])
    preact = (emb @ params["lstm1.i2h.weights"].T + params["lstm1.i2h.bias"]
              + h @ params["lstm1.h2h.weights"].T + params["lstm1.h2h.bias"])
    gates = jax.nn.sigmoid(preact[:, :3 * H])
    g_t = jnp.tanh(preact[:, 3 * H:])
    i_t, f_t, o_t = gates[:, :H], gates[:, H:2 * H], gates[:, 2 * H:]
    c_t = c * f_t + i_t * g_t
    h_t = o_t * jnp.tanh(c_t)
    out = h_t @ params["linear2.weights"].T + params["linear2.bias"]
    return out, (h_t, c_t)


def _reference_sequence(xs, hidden, params):
    h, c = hidden
    outs = []
    for t in range(xs.shape[0]):
        out, (h, c) = _reference_step(xs[t], (h, c), params)
        outs.append(out)
    return jnp.stack(outs), (h, c)


def _init_params(key):
    """Deterministic synthetic parameters with the module's shapes (PyTorch convention)."""
    ks = jax.random.split(key, 8)
    std = 1.0 / (HIDDEN ** 0.5)
    return {
        "linear1.weights": jax.random.uniform(ks[0], (EMBED, OUT), jnp.float32, -0.5, 0.5),
        "linear1.bias": jnp.zeros((EMBED,), jnp.float32),
        "lstm1.i2h.weights": jax.random.uniform(ks[1], (4 * HIDDEN, EMBED), jnp.float32, -std, std),
        "lstm1.i2h.bias": jax.random.uniform(ks[2], (4 * HIDDEN,), jnp.float32, -std, std),
        "lstm1.h2h.weights": jax.random.uniform(ks[3], (4 * HIDDEN, HIDDEN), jnp.float32, -std, std),
        "lstm1.h2h.bias": jax.random.uniform(ks[4], (4 * HIDDEN,), jnp.float32, -std, std),
        "linear2.weights": jax.random.uniform(ks[5], (OUT, HIDDEN), jnp.float32, -0.5, 0.5),
        "linear2.bias": jnp.zeros((OUT,), jnp.float32),
    }


if __name__ == "__main__":
    key = jax.random.PRNGKey(0)
    kx, kh, kc, kp = jax.random.split(key, 4)

    B, T = 4, 8
    xs = jax.random.normal(kx, (T, B, OUT), jnp.float32)
    h0 = jax.random.normal(kh, (B, HIDDEN), jnp.float32)
    c0 = jax.random.normal(kc, (B, HIDDEN), jnp.float32)

    params = _init_params(kp)
    param_slab = prepare_params(params)          # hoisted: done once, not per call

    # Fused multi-step decode: one launch, one weight load, one output writeback.
    fused = jax.jit(meta_decoder_rnn_sequence)
    out_seq, (h_t, c_t) = fused(xs, (h0, c0), param_slab)
    jax.block_until_ready((out_seq, h_t, c_t))

    ref_out, (ref_h, ref_c) = _reference_sequence(xs, (h0, c0), params)
    assert jnp.allclose(out_seq, ref_out, atol=1e-4), "sequence output mismatch"
    assert jnp.allclose(h_t, ref_h, atol=1e-4), "h_T mismatch"
    assert jnp.allclose(c_t, ref_c, atol=1e-4), "c_T mismatch"

    # Single-step API (matches MetaDecoderRNN.forward exactly).
    out1, (h1, c1) = meta_decoder_rnn(xs[0], (h0, c0), param_slab)
    jax.block_until_ready((out1, h1, c1))
    ref1_out, (ref1_h, ref1_c) = _reference_step(xs[0], (h0, c0), params)
    assert jnp.allclose(out1, ref1_out, atol=1e-4), "single-step output mismatch"
    assert jnp.allclose(h1, ref1_h, atol=1e-4), "single-step h_t mismatch"
    assert jnp.allclose(c1, ref1_c, atol=1e-4), "single-step c_t mismatch"

    print("KERNEL_OK")
</pallas_src>

<mosaic_0001>
module attributes {stable_mosaic.version = 11 : i64} {
  func.func @_decoder_seq_kernel(%arg0: i32, %arg1: memref<32x2xf32, #tpu.memory_space<vmem>>, %arg2: memref<4x16xf32, #tpu.memory_space<vmem>>, %arg3: memref<4x16xf32, #tpu.memory_space<vmem>>, %arg4: memref<56x64xf32, #tpu.memory_space<vmem>>, %arg5: memref<32x2xf32, #tpu.memory_space<vmem>>, %arg6: memref<4x16xf32, #tpu.memory_space<vmem>>, %arg7: memref<4x16xf32, #tpu.memory_space<vmem>>, %arg8: memref<32x64xf32, #tpu.memory_space<vmem>>, %arg9: memref<32x16xf32, #tpu.memory_space<vmem>>) attributes {dimension_semantics = [#tpu.dimension_semantics<arbitrary>], iteration_bounds = array<i64: 1>, scalar_prefetch = 0 : i64, scratch_operands = 2 : i64, tpu.core_type = #tpu.core_type<tc>, window_params = [{pipeline_mode = #tpu.pipeline_mode<synchronous>, transform_indices = @transform_0, window_bounds = array<i64: 32, 2>}, {pipeline_mode = #tpu.pipeline_mode<synchronous>, transform_indices = @transform_1, window_bounds = array<i64: 4, 16>}, {pipeline_mode = #tpu.pipeline_mode<synchronous>, transform_indices = @transform_2, window_bounds = array<i64: 4, 16>}, {pipeline_mode = #tpu.pipeline_mode<synchronous>, transform_indices = @transform_3, window_bounds = array<i64: 56, 64>}, {pipeline_mode = #tpu.pipeline_mode<synchronous>, transform_indices = @transform_4, window_bounds = array<i64: 32, 2>}, {pipeline_mode = #tpu.pipeline_mode<synchronous>, transform_indices = @transform_5, window_bounds = array<i64: 4, 16>}, {pipeline_mode = #tpu.pipeline_mode<synchronous>, transform_indices = @transform_6, window_bounds = array<i64: 4, 16>}]} {
    %c48 = arith.constant 48 : index
    %c0 = arith.constant 0 : index
    %0 = vector.load %arg4[%c48, %c0] : memref<56x64xf32, #tpu.memory_space<vmem>>, vector<1x8xf32>
    %c8 = arith.constant 8 : index
    %c0_0 = arith.constant 0 : index
    %1 = vector.load %arg4[%c8, %c0_0] : memref<56x64xf32, #tpu.memory_space<vmem>>, vector<8x64xf32>
    %c16 = arith.constant 16 : index
    %c0_1 = arith.constant 0 : index
    %2 = vector.load %arg4[%c16, %c0_1] : memref<56x64xf32, #tpu.memory_space<vmem>>, vector<16x64xf32>
    %c49 = arith.constant 49 : index
    %c0_2 = arith.constant 0 : index
    %3 = vector.load %arg4[%c49, %c0_2] : memref<56x64xf32, #tpu.memory_space<vmem>>, vector<1x64xf32>
    %c32 = arith.constant 32 : index
    %c0_3 = arith.constant 0 : index
    %4 = vector.load %arg4[%c32, %c0_3] : memref<56x64xf32, #tpu.memory_space<vmem>>, vector<16x2xf32>
    %c50 = arith.constant 50 : index
    %c0_4 = arith.constant 0 : index
    %5 = vector.load %arg4[%c50, %c0_4] : memref<56x64xf32, #tpu.memory_space<vmem>>, vector<1x2xf32>
    %c0_5 = arith.constant 0 : index
    %c0_6 = arith.constant 0 : index
    %6 = vector.load %arg1[%c0_5, %c0_6] : memref<32x2xf32, #tpu.memory_space<vmem>>, vector<32x2xf32>
    %7 = vector.extract_strided_slice %6 {offsets = [0, 0], sizes = [32, 1], strides = [1, 1]} : vector<32x2xf32> to vector<32x1xf32>
    %c0_7 = arith.constant 0 : index
    %c0_8 = arith.constant 0 : index
    %8 = vector.load %arg4[%c0_7, %c0_8] : memref<56x64xf32, #tpu.memory_space<vmem>>, vector<1x8xf32>
    %9 = vector.broadcast %7 : vector<32x1xf32> to vector<32x8xf32>
    %10 = vector.broadcast %8 : vector<1x8xf32> to vector<32x8xf32>
    %11 = arith.mulf %9, %10 : vector<32x8xf32>
    %12 = vector.broadcast %0 : vector<1x8xf32> to vector<32x8xf32>
    %13 = arith.addf %12, %11 : vector<32x8xf32>
    %14 = vector.extract_strided_slice %6 {offsets = [0, 1], sizes = [32, 1], strides = [1, 1]} : vector<32x2xf32> to vector<32x1xf32>
    %c1 = arith.constant 1 : index
    %c0_9 = arith.constant 0 : index
    %15 = vector.load %arg4[%c1, %c0_9] : memref<56x64xf32, #tpu.memory_space<vmem>>, vector<1x8xf32>
    %16 = vector.broadcast %14 : vector<32x1xf32> to vector<32x8xf32>
    %17 = vector.broadcast %15 : vector<1x8xf32> to vector<32x8xf32>
    %18 = arith.mulf %16, %17 : vector<32x8xf32>
    %19 = arith.addf %13, %18 : vector<32x8xf32>
    %cst = arith.constant 0.000000e+00 : f32
    %20 = vector.broadcast %cst : f32 to vector<32x8xf32>
    %21 = arith.maximumf %19, %20 : vector<32x8xf32>
    %cst_10 = arith.constant dense<0.000000e+00> : vector<32x64xf32>
    %22 = tpu.matmul %21, %1, %cst_10 {dimension_numbers = #tpu.dot_dimension_numbers<[1], [0], [0], [1], [0, 0, 1, 1], [], []>} : vector<32x8xf32>, vector<8x64xf32>, vector<32x64xf32> -> vector<32x64xf32>
    %23 = vector.broadcast %3 : vector<1x64xf32> to vector<32x64xf32>
    %24 = arith.addf %22, %23 : vector<32x64xf32>
    %c0_11 = arith.constant 0 : index
    %c0_12 = arith.constant 0 : index
    %25 = vector.load %arg8[%c0_11, %c0_12] : memref<32x64xf32, #tpu.memory_space<vmem>>, vector<32x64xf32>
    tpu.vector_store %arg8[%c0_11, %c0_12], %24 {strides = array<i32>} : memref<32x64xf32, #tpu.memory_space<vmem>>, vector<32x64xf32>,
    %c0_13 = arith.constant 0 : index
    %c0_14 = arith.constant 0 : index
    %26 = vector.load %arg2[%c0_13, %c0_14] : memref<4x16xf32, #tpu.memory_space<vmem>>, vector<4x16xf32>
    %c0_15 = arith.constant 0 : index
    %c0_16 = arith.constant 0 : index
    %27 = vector.load %arg3[%c0_15, %c0_16] : memref<4x16xf32, #tpu.memory_space<vmem>>, vector<4x16xf32>
    %c0_17 = arith.constant 0 : index
    %c0_18 = arith.constant 0 : index
    %28 = vector.load %arg8[%c0_17, %c0_18] : memref<32x64xf32, #tpu.memory_space<vmem>>, vector<4x64xf32>
    %cst_19 = arith.constant dense<0.000000e+00> : vector<4x64xf32>
    %29 = tpu.matmul %26, %2, %cst_19 {dimension_numbers = #tpu.dot_dimension_numbers<[1], [0], [0], [1], [0, 0, 1, 1], [], []>} : vector<4x16xf32>, vector<16x64xf32>, vector<4x64xf32> -> vector<4x64xf32>
    %30 = arith.addf %28, %29 : vector<4x64xf32>
    %31 = vector.extract_strided_slice %30 {offsets = [0, 0], sizes = [4, 48], strides = [1, 1]} : vector<4x64xf32> to vector<4x48xf32>
    %32 = arith.negf %31 : vector<4x48xf32>
    %33 = math.exp %32 : vector<4x48xf32>
    %cst_20 = arith.constant 1.000000e+00 : f32
    %34 = vector.broadcast %cst_20 : f32 to vector<4x48xf32>
    %35 = arith.addf %34, %33 : vector<4x48xf32>
    %36 = arith.divf %34, %35 : vector<4x48xf32>
    %37 = vector.extract_strided_slice %30 {offsets = [0, 48], sizes = [4, 16], strides = [1, 1]} : vector<4x64xf32> to vector<4x16xf32>
    %38 = math.tanh %37 : vector<4x16xf32>
    %39 = vector.extract_strided_slice %36 {offsets = [0, 0], sizes = [4, 16], strides = [1, 1]} : vector<4x48xf32> to vector<4x16xf32>
    %40 = vector.extract_strided_slice %36 {offsets = [0, 16], sizes = [4, 16], strides = [1, 1]} : vector<4x48xf32> to vector<4x16xf32>
    %41 = vector.extract_strided_slice %36 {offsets = [0, 32], sizes = [4, 16], strides = [1, 1]} : vector<4x48xf32> to vector<4x16xf32>
    %42 = arith.mulf %27, %40 : vector<4x16xf32>
    %43 = arith.mulf %39, %38 : vector<4x16xf32>
    %44 = arith.addf %42, %43 : vector<4x16xf32>
    %45 = math.tanh %44 : vector<4x16xf32>
    %46 = arith.mulf %41, %45 : vector<4x16xf32>
    %c0_21 = arith.constant 0 : index
    %c0_22 = arith.constant 0 : index
    %47 = vector.load %arg9[%c0_21, %c0_22] : memref<32x16xf32, #tpu.memory_space<vmem>>, vector<4x16xf32>
    tpu.vector_store %arg9[%c0_21, %c0_22], %46 {strides = array<i32>} : memref<32x16xf32, #tpu.memory_space<vmem>>, vector<4x16xf32>,
    %c4 = arith.constant 4 : index
    %c0_23 = arith.constant 0 : index
    %48 = vector.load %arg8[%c4, %c0_23] : memref<32x64xf32, #tpu.memory_space<vmem>>, vector<4x64xf32>
    %cst_24 = arith.constant dense<0.000000e+00> : vector<4x64xf32>
    %49 = tpu.matmul %46, %2, %cst_24 {dimension_numbers = #tpu.dot_dimension_numbers<[1], [0], [0], [1], [0, 0, 1, 1], [], []>} : vector<4x16xf32>, vector<16x64xf32>, vector<4x64xf32> -> vector<4x64xf32>
    %50 = arith.addf %48, %49 : vector<4x64xf32>
    %51 = vector.extract_strided_slice %50 {offsets = [0, 0], sizes = [4, 48], strides = [1, 1]} : vector<4x64xf32> to vector<4x48xf32>
    %52 = arith.negf %51 : vector<4x48xf32>
    %53 = math.exp %52 : vector<4x48xf32>
    %cst_25 = arith.constant 1.000000e+00 : f32
    %54 = vector.broadcast %cst_25 : f32 to vector<4x48xf32>
    %55 = arith.addf %54, %53 : vector<4x48xf32>
    %56 = arith.divf %54, %55 : vector<4x48xf32>
    %57 = vector.extract_strided_slice %50 {offsets = [0, 48], sizes = [4, 16], strides = [1, 1]} : vector<4x64xf32> to vector<4x16xf32>
    %58 = math.tanh %57 : vector<4x16xf32>
    %59 = vector.extract_strided_slice %56 {offsets = [0, 0], sizes = [4, 16], strides = [1, 1]} : vector<4x48xf32> to vector<4x16xf32>
    %60 = vector.extract_strided_slice %56 {offsets = [0, 16], sizes = [4, 16], strides = [1, 1]} : vector<4x48xf32> to vector<4x16xf32>
    %61 = vector.extract_strided_slice %56 {offsets = [0, 32], sizes = [4, 16], strides = [1, 1]} : vector<4x48xf32> to vector<4x16xf32>
    %62 = arith.mulf %44, %60 : vector<4x16xf32>
    %63 = arith.mulf %59, %58 : vector<4x16xf32>
    %64 = arith.addf %62, %63 : vector<4x16xf32>
    %65 = math.tanh %64 : vector<4x16xf32>
    %66 = arith.mulf %61, %65 : vector<4x16xf32>
    %c4_26 = arith.constant 4 : index
    %c0_27 = arith.constant 0 : index
    %67 = vector.load %arg9[%c4_26, %c0_27] : memref<32x16xf32, #tpu.memory_space<vmem>>, vector<4x16xf32>
    tpu.vector_store %arg9[%c4_26, %c0_27], %66 {strides = array<i32>} : memref<32x16xf32, #tpu.memory_space<vmem>>, vector<4x16xf32>,
    %c8_28 = arith.constant 8 : index
    %c0_29 = arith.constant 0 : index
    %68 = vector.load %arg8[%c8_28, %c0_29] : memref<32x64xf32, #tpu.memory_space<vmem>>, vector<4x64xf32>
    %cst_30 = arith.constant dense<0.000000e+00> : vector<4x64xf32>
    %69 = tpu.matmul %66, %2, %cst_30 {dimension_numbers = #tpu.dot_dimension_numbers<[1], [0], [0], [1], [0, 0, 1, 1], [], []>} : vector<4x16xf32>, vector<16x64xf32>, vector<4x64xf32> -> vector<4x64xf32>
    %70 = arith.addf %68, %69 : vector<4x64xf32>
    %71 = vector.extract_strided_slice %70 {offsets = [0, 0], sizes = [4, 48], strides = [1, 1]} : vector<4x64xf32> to vector<4x48xf32>
    %72 = arith.negf %71 : vector<4x48xf32>
    %73 = math.exp %72 : vector<4x48xf32>
    %cst_31 = arith.constant 1.000000e+00 : f32
    %74 = vector.broadcast %cst_31 : f32 to vector<4x48xf32>
    %75 = arith.addf %74, %73 : vector<4x48xf32>
    %76 = arith.divf %74, %75 : vector<4x48xf32>
    %77 = vector.extract_strided_slice %70 {offsets = [0, 48], sizes = [4, 16], strides = [1, 1]} : vector<4x64xf32> to vector<4x16xf32>
    %78 = math.tanh %77 : vector<4x16xf32>
    %79 = vector.extract_strided_slice %76 {offsets = [0, 0], sizes = [4, 16], strides = [1, 1]} : vector<4x48xf32> to vector<4x16xf32>
    %80 = vector.extract_strided_slice %76 {offsets = [0, 16], sizes = [4, 16], strides = [1, 1]} : vector<4x48xf32> to vector<4x16xf32>
    %81 = vector.extract_strided_slice %76 {offsets = [0, 32], sizes = [4, 16], strides = [1, 1]} : vector<4x48xf32> to vector<4x16xf32>
    %82 = arith.mulf %64, %80 : vector<4x16xf32>
    %83 = arith.mulf %79, %78 : vector<4x16xf32>
    %84 = arith.addf %82, %83 : vector<4x16xf32>
    %85 = math.tanh %84 : vector<4x16xf32>
    %86 = arith.mulf %81, %85 : vector<4x16xf32>
    %c8_32 = arith.constant 8 : index
    %c0_33 = arith.constant 0 : index
    %87 = vector.load %arg9[%c8_32, %c0_33] : memref<32x16xf32, #tpu.memory_space<vmem>>, vector<4x16xf32>
    tpu.vector_store %arg9[%c8_32, %c0_33], %86 {strides = array<i32>} : memref<32x16xf32, #tpu.memory_space<vmem>>, vector<4x16xf32>,
    %c12 = arith.constant 12 : index
    %c0_34 = arith.constant 0 : index
    %88 = vector.load %arg8[%c12, %c0_34] : memref<32x64xf32, #tpu.memory_space<vmem>>, vector<4x64xf32>
    %cst_35 = arith.constant dense<0.000000e+00> : vector<4x64xf32>
    %89 = tpu.matmul %86, %2, %cst_35 {dimension_numbers = #tpu.dot_dimension_numbers<[1], [0], [0], [1], [0, 0, 1, 1], [], []>} : vector<4x16xf32>, vector<16x64xf32>, vector<4x64xf32> -> vector<4x64xf32>
    %90 = arith.addf %88, %89 : vector<4x64xf32>
    %91 = vector.extract_strided_slice %90 {offsets = [0, 0], sizes = [4, 48], strides = [1, 1]} : vector<4x64xf32> to vector<4x48xf32>
    %92 = arith.negf %91 : vector<4x48xf32>
    %93 = math.exp %92 : vector<4x48xf32>
    %cst_36 = arith.constant 1.000000e+00 : f32
    %94 = vector.broadcast %cst_36 : f32 to vector<4x48xf32>
    %95 = arith.addf %94, %93 : vector<4x48xf32>
    %96 = arith.divf %94, %95 : vector<4x48xf32>
    %97 = vector.extract_strided_slice %90 {offsets = [0, 48], sizes = [4, 16], strides = [1, 1]} : vector<4x64xf32> to vector<4x16xf32>
    %98 = math.tanh %97 : vector<4x16xf32>
    %99 = vector.extract_strided_slice %96 {offsets = [0, 0], sizes = [4, 16], strides = [1, 1]} : vector<4x48xf32> to vector<4x16xf32>
    %100 = vector.extract_strided_slice %96 {offsets = [0, 16], sizes = [4, 16], strides = [1, 1]} : vector<4x48xf32> to vector<4x16xf32>
    %101 = vector.extract_strided_slice %96 {offsets = [0, 32], sizes = [4, 16], strides = [1, 1]} : vector<4x48xf32> to vector<4x16xf32>
    %102 = arith.mulf %84, %100 : vector<4x16xf32>
    %103 = arith.mulf %99, %98 : vector<4x16xf32>
    %104 = arith.addf %102, %103 : vector<4x16xf32>
    %105 = math.tanh %104 : vector<4x16xf32>
    %106 = arith.mulf %101, %105 : vector<4x16xf32>
    %c12_37 = arith.constant 12 : index
    %c0_38 = arith.constant 0 : index
    %107 = vector.load %arg9[%c12_37, %c0_38] : memref<32x16xf32, #tpu.memory_space<vmem>>, vector<4x16xf32>
    tpu.vector_store %arg9[%c12_37, %c0_38], %106 {strides = array<i32>} : memref<32x16xf32, #tpu.memory_space<vmem>>, vector<4x16xf32>,
    %c16_39 = arith.constant 16 : index
    %c0_40 = arith.constant 0 : index
    %108 = vector.load %arg8[%c16_39, %c0_40] : memref<32x64xf32, #tpu.memory_space<vmem>>, vector<4x64xf32>
    %cst_41 = arith.constant dense<0.000000e+00> : vector<4x64xf32>
    %109 = tpu.matmul %106, %2, %cst_41 {dimension_numbers = #tpu.dot_dimension_numbers<[1], [0], [0], [1], [0, 0, 1, 1], [], []>} : vector<4x16xf32>, vector<16x64xf32>, vector<4x64xf32> -> vector<4x64xf32>
    %110 = arith.addf %108, %109 : vector<4x64xf32>
    %111 = vector.extract_strided_slice %110 {offsets = [0, 0], sizes = [4, 48], strides = [1, 1]} : vector<4x64xf32> to vector<4x48xf32>
    %112 = arith.negf %111 : vector<4x48xf32>
    %113 = math.exp %112 : vector<4x48xf32>
    %cst_42 = arith.constant 1.000000e+00 : f32
    %114 = vector.broadcast %cst_42 : f32 to vector<4x48xf32>
    %115 = arith.addf %114, %113 : vector<4x48xf32>
    %116 = arith.divf %114, %115 : vector<4x48xf32>
    %117 = vector.extract_strided_slice %110 {offsets = [0, 48], sizes = [4, 16], strides = [1, 1]} : vector<4x64xf32> to vector<4x16xf32>
    %118 = math.tanh %117 : vector<4x16xf32>
    %119 = vector.extract_strided_slice %116 {offsets = [0, 0], sizes = [4, 16], strides = [1, 1]} : vector<4x48xf32> to vector<4x16xf32>
    %120 = vector.extract_strided_slice %116 {offsets = [0, 16], sizes = [4, 16], strides = [1, 1]} : vector<4x48xf32> to vector<4x16xf32>
    %121 = vector.extract_strided_slice %116 {offsets = [0, 32], sizes = [4, 16], strides = [1, 1]} : vector<4x48xf32> to vector<4x16xf32>
    %122 = arith.mulf %104, %120 : vector<4x16xf32>
    %123 = arith.mulf %119, %118 : vector<4x16xf32>
    %124 = arith.addf %122, %123 : vector<4x16xf32>
    %125 = math.tanh %124 : vector<4x16xf32>
    %126 = arith.mulf %121, %125 : vector<4x16xf32>
    %c16_43 = arith.constant 16 : index
    %c0_44 = arith.constant 0 : index
    %127 = vector.load %arg9[%c16_43, %c0_44] : memref<32x16xf32, #tpu.memory_space<vmem>>, vector<4x16xf32>
    tpu.vector_store %arg9[%c16_43, %c0_44], %126 {strides = array<i32>} : memref<32x16xf32, #tpu.memory_space<vmem>>, vector<4x16xf32>,
    %c20 = arith.constant 20 : index
    %c0_45 = arith.constant 0 : index
    %128 = vector.load %arg8[%c20, %c0_45] : memref<32x64xf32, #tpu.memory_space<vmem>>, vector<4x64xf32>
    %cst_46 = arith.constant dense<0.000000e+00> : vector<4x64xf32>
    %129 = tpu.matmul %126, %2, %cst_46 {dimension_numbers = #tpu.dot_dimension_numbers<[1], [0], [0], [1], [0, 0, 1, 1], [], []>} : vector<4x16xf32>, vector<16x64xf32>, vector<4x64xf32> -> vector<4x64xf32>
    %130 = arith.addf %128, %129 : vector<4x64xf32>
    %131 = vector.extract_strided_slice %130 {offsets = [0, 0], sizes = [4, 48], strides = [1, 1]} : vector<4x64xf32> to vector<4x48xf32>
    %132 = arith.negf %131 : vector<4x48xf32>
    %133 = math.exp %132 : vector<4x48xf32>
    %cst_47 = arith.constant 1.000000e+00 : f32
    %134 = vector.broadcast %cst_47 : f32 to vector<4x48xf32>
    %135 = arith.addf %134, %133 : vector<4x48xf32>
    %136 = arith.divf %134, %135 : vector<4x48xf32>
    %137 = vector.extract_strided_slice %130 {offsets = [0, 48], sizes = [4, 16], strides = [1, 1]} : vector<4x64xf32> to vector<4x16xf32>
    %138 = math.tanh %137 : vector<4x16xf32>
    %139 = vector.extract_strided_slice %136 {offsets = [0, 0], sizes = [4, 16], strides = [1, 1]} : vector<4x48xf32> to vector<4x16xf32>
    %140 = vector.extract_strided_slice %136 {offsets = [0, 16], sizes = [4, 16], strides = [1, 1]} : vector<4x48xf32> to vector<4x16xf32>
    %141 = vector.extract_strided_slice %136 {offsets = [0, 32], sizes = [4, 16], strides = [1, 1]} : vector<4x48xf32> to vector<4x16xf32>
    %142 = arith.mulf %124, %140 : vector<4x16xf32>
    %143 = arith.mulf %139, %138 : vector<4x16xf32>
    %144 = arith.addf %142, %143 : vector<4x16xf32>
    %145 = math.tanh %144 : vector<4x16xf32>
    %146 = arith.mulf %141, %145 : vector<4x16xf32>
    %c20_48 = arith.constant 20 : index
    %c0_49 = arith.constant 0 : index
    %147 = vector.load %arg9[%c20_48, %c0_49] : memref<32x16xf32, #tpu.memory_space<vmem>>, vector<4x16xf32>
    tpu.vector_store %arg9[%c20_48, %c0_49], %146 {strides = array<i32>} : memref<32x16xf32, #tpu.memory_space<vmem>>, vector<4x16xf32>,
    %c24 = arith.constant 24 : index
    %c0_50 = arith.constant 0 : index
    %148 = vector.load %arg8[%c24, %c0_50] : memref<32x64xf32, #tpu.memory_space<vmem>>, vector<4x64xf32>
    %cst_51 = arith.constant dense<0.000000e+00> : vector<4x64xf32>
    %149 = tpu.matmul %146, %2, %cst_51 {dimension_numbers = #tpu.dot_dimension_numbers<[1], [0], [0], [1], [0, 0, 1, 1], [], []>} : vector<4x16xf32>, vector<16x64xf32>, vector<4x64xf32> -> vector<4x64xf32>
    %150 = arith.addf %148, %149 : vector<4x64xf32>
    %151 = vector.extract_strided_slice %150 {offsets = [0, 0], sizes = [4, 48], strides = [1, 1]} : vector<4x64xf32> to vector<4x48xf32>
    %152 = arith.negf %151 : vector<4x48xf32>
    %153 = math.exp %152 : vector<4x48xf32>
    %cst_52 = arith.constant 1.000000e+00 : f32
    %154 = vector.broadcast %cst_52 : f32 to vector<4x48xf32>
    %155 = arith.addf %154, %153 : vector<4x48xf32>
    %156 = arith.divf %154, %155 : vector<4x48xf32>
    %157 = vector.extract_strided_slice %150 {offsets = [0, 48], sizes = [4, 16], strides = [1, 1]} : vector<4x64xf32> to vector<4x16xf32>
    %158 = math.tanh %157 : vector<4x16xf32>
    %159 = vector.extract_strided_slice %156 {offsets = [0, 0], sizes = [4, 16], strides = [1, 1]} : vector<4x48xf32> to vector<4x16xf32>
    %160 = vector.extract_strided_slice %156 {offsets = [0, 16], sizes = [4, 16], strides = [1, 1]} : vector<4x48xf32> to vector<4x16xf32>
    %161 = vector.extract_strided_slice %156 {offsets = [0, 32], sizes = [4, 16], strides = [1, 1]} : vector<4x48xf32> to vector<4x16xf32>
    %162 = arith.mulf %144, %160 : vector<4x16xf32>
    %163 = arith.mulf %159, %158 : vector<4x16xf32>
    %164 = arith.addf %162, %163 : vector<4x16xf32>
    %165 = math.tanh %164 : vector<4x16xf32>
    %166 = arith.mulf %161, %165 : vector<4x16xf32>
    %c24_53 = arith.constant 24 : index
    %c0_54 = arith.constant 0 : index
    %167 = vector.load %arg9[%c24_53, %c0_54] : memref<32x16xf32, #tpu.memory_space<vmem>>, vector<4x16xf32>
    tpu.vector_store %arg9[%c24_53, %c0_54], %166 {strides = array<i32>} : memref<32x16xf32, #tpu.memory_space<vmem>>, vector<4x16xf32>,
    %c28 = arith.constant 28 : index
    %c0_55 = arith.constant 0 : index
    %168 = vector.load %arg8[%c28, %c0_55] : memref<32x64xf32, #tpu.memory_space<vmem>>, vector<4x64xf32>
    %cst_56 = arith.constant dense<0.000000e+00> : vector<4x64xf32>
    %169 = tpu.matmul %166, %2, %cst_56 {dimension_numbers = #tpu.dot_dimension_numbers<[1], [0], [0], [1], [0, 0, 1, 1], [], []>} : vector<4x16xf32>, vector<16x64xf32>, vector<4x64xf32> -> vector<4x64xf32>
    %170 = arith.addf %168, %169 : vector<4x64xf32>
    %171 = vector.extract_strided_slice %170 {offsets = [0, 0], sizes = [4, 48], strides = [1, 1]} : vector<4x64xf32> to vector<4x48xf32>
    %172 = arith.negf %171 : vector<4x48xf32>
    %173 = math.exp %172 : vector<4x48xf32>
    %cst_57 = arith.constant 1.000000e+00 : f32
    %174 = vector.broadcast %cst_57 : f32 to vector<4x48xf32>
    %175 = arith.addf %174, %173 : vector<4x48xf32>
    %176 = arith.divf %174, %175 : vector<4x48xf32>
    %177 = vector.extract_strided_slice %170 {offsets = [0, 48], sizes = [4, 16], strides = [1, 1]} : vector<4x64xf32> to vector<4x16xf32>
    %178 = math.tanh %177 : vector<4x16xf32>
    %179 = vector.extract_strided_slice %176 {offsets = [0, 0], sizes = [4, 16], strides = [1, 1]} : vector<4x48xf32> to vector<4x16xf32>
    %180 = vector.extract_strided_slice %176 {offsets = [0, 16], sizes = [4, 16], strides = [1, 1]} : vector<4x48xf32> to vector<4x16xf32>
    %181 = vector.extract_strided_slice %176 {offsets = [0, 32], sizes = [4, 16], strides = [1, 1]} : vector<4x48xf32> to vector<4x16xf32>
    %182 = arith.mulf %164, %180 : vector<4x16xf32>
    %183 = arith.mulf %179, %178 : vector<4x16xf32>
    %184 = arith.addf %182, %183 : vector<4x16xf32>
    %185 = math.tanh %184 : vector<4x16xf32>
    %186 = arith.mulf %181, %185 : vector<4x16xf32>
    %c28_58 = arith.constant 28 : index
    %c0_59 = arith.constant 0 : index
    %187 = vector.load %arg9[%c28_58, %c0_59] : memref<32x16xf32, #tpu.memory_space<vmem>>, vector<4x16xf32>
    tpu.vector_store %arg9[%c28_58, %c0_59], %186 {strides = array<i32>} : memref<32x16xf32, #tpu.memory_space<vmem>>, vector<4x16xf32>,
    %c0_60 = arith.constant 0 : index
    %c0_61 = arith.constant 0 : index
    %188 = vector.load %arg6[%c0_60, %c0_61] : memref<4x16xf32, #tpu.memory_space<vmem>>, vector<4x16xf32>
    tpu.vector_store %arg6[%c0_60, %c0_61], %186 {strides = array<i32>} : memref<4x16xf32, #tpu.memory_space<vmem>>, vector<4x16xf32>,
    %c0_62 = arith.constant 0 : index
    %c0_63 = arith.constant 0 : index
    %189 = vector.load %arg7[%c0_62, %c0_63] : memref<4x16xf32, #tpu.memory_space<vmem>>, vector<4x16xf32>
    tpu.vector_store %arg7[%c0_62, %c0_63], %184 {strides = array<i32>} : memref<4x16xf32, #tpu.memory_space<vmem>>, vector<4x16xf32>,
    %c0_64 = arith.constant 0 : index
    %c0_65 = arith.constant 0 : index
    %190 = vector.load %arg9[%c0_64, %c0_65] : memref<32x16xf32, #tpu.memory_space<vmem>>, vector<32x16xf32>
    %cst_66 = arith.constant dense<0.000000e+00> : vector<32x2xf32>
    %191 = tpu.matmul %190, %4, %cst_66 {dimension_numbers = #tpu.dot_dimension_numbers<[1], [0], [0], [1], [0, 0, 1, 1], [], []>} : vector<32x16xf32>, vector<16x2xf32>, vector<32x2xf32> -> vector<32x2xf32>
    %192 = vector.broadcast %5 : vector<1x2xf32> to vector<32x2xf32>
    %193 = arith.addf %191, %192 : vector<32x2xf32>
    %c0_67 = arith.constant 0 : index
    %c0_68 = arith.constant 0 : index
    %194 = vector.load %arg5[%c0_67, %c0_68] : memref<32x2xf32, #tpu.memory_space<vmem>>, vector<32x2xf32>
    tpu.vector_store %arg5[%c0_67, %c0_68], %193 {strides = array<i32>} : memref<32x2xf32, #tpu.memory_space<vmem>>, vector<32x2xf32>,
    return
  }
  func.func @transform_0(%arg0: i32) -> (i32, i32) {
    %c0_i32 = arith.constant 0 : i32
    %c0_i32_0 = arith.constant 0 : i32
    %c0_i32_1 = arith.constant 0 : i32
    return %c0_i32, %c0_i32_0 : i32, i32
  }
  func.func @transform_1(%arg0: i32) -> (i32, i32) {
    %c0_i32 = arith.constant 0 : i32
    %c0_i32_0 = arith.constant 0 : i32
    %c0_i32_1 = arith.constant 0 : i32
    return %c0_i32, %c0_i32_0 : i32, i32
  }
  func.func @transform_2(%arg0: i32) -> (i32, i32) {
    %c0_i32 = arith.constant 0 : i32
    %c0_i32_0 = arith.constant 0 : i32
    %c0_i32_1 = arith.constant 0 : i32
    return %c0_i32, %c0_i32_0 : i32, i32
  }
  func.func @transform_3(%arg0: i32) -> (i32, i32) {
    %c0_i32 = arith.constant 0 : i32
    %c0_i32_0 = arith.constant 0 : i32
    %c0_i32_1 = arith.constant 0 : i32
    return %c0_i32, %c0_i32_0 : i32, i32
  }
  func.func @transform_4(%arg0: i32) -> (i32, i32) {
    %c0_i32 = arith.constant 0 : i32
    %c0_i32_0 = arith.constant 0 : i32
    %c0_i32_1 = arith.constant 0 : i32
    return %c0_i32, %c0_i32_0 : i32, i32
  }
  func.func @transform_5(%arg0: i32) -> (i32, i32) {
    %c0_i32 = arith.constant 0 : i32
    %c0_i32_0 = arith.constant 0 : i32
    %c0_i32_1 = arith.constant 0 : i32
    return %c0_i32, %c0_i32_0 : i32, i32
  }
  func.func @transform_6(%arg0: i32) -> (i32, i32) {
    %c0_i32 = arith.constant 0 : i32
    %c0_i32_0 = arith.constant 0 : i32
    %c0_i32_1 = arith.constant 0 : i32
    return %c0_i32, %c0_i32_0 : i32, i32
  }
}

</mosaic_0001>

<llo_original>
// kernel: meta_decoder_rnn_sequence.1
$region0: #{meta_decoder_rnn_sequence.1}
  #allocation0 [shape = 'u32[]', space=smem, size = 0x4, offset = 0x4, fixed_abs, tag = 'smem constant byte address 0x4 - core index']
  #allocation1 [shape = 'u32[144,128]{1,0:T(1,128)}', space=vmem, size = 0x12000, scoped, tag = 'internal scratch']
  #allocation2 [shape = 'f32[32,64]{1,0:T(8,128)}', space=vmem, size = 0x4000, scoped, tag = 'scratch operand']
  #allocation3 [shape = 'f32[32,16]{1,0:T(8,128)}', space=vmem, size = 0x4000, scoped, tag = 'scratch operand']
  %s0 = inlined_call_operand.vmem [shape: f32[32,2], index: 0, kind: input, shape index: {}]
  %s1 = inlined_call_operand.vmem [shape: f32[4,16], index: 1, kind: input, shape index: {}]
  %s2 = inlined_call_operand.vmem [shape: f32[4,16], index: 2, kind: input, shape index: {}]
  %s3 = inlined_call_operand.hbm [shape: f32[56,64], index: 3, kind: input, shape index: {}]
  %s4 = inlined_call_operand.vmem [shape: f32[32,2], index: 4, kind: output, shape index: {0}]
  %s5 = inlined_call_operand.hbm [shape: f32[4,16], index: 5, kind: output, shape index: {1}]
  %s6 = inlined_call_operand.hbm [shape: f32[4,16], index: 6, kind: output, shape index: {2}]
  %7 = xla_tuple %s4, %s5, %s6
  %s8 = sld [smem:[#allocation0]]
  $region46: #{meta_decoder_rnn_sequence.1} parent=0
    _
  %s10 = ssub.s32 1, %s8
  %s11 = scalar_select 0, %s10, %s8
  $region1: #{meta_decoder_rnn_sequence.1} parent=0
    #allocation4 [shape = 'u8[28672]{0}', space=vmem, size = 0x7000, scoped, tag = 'input window, operand 3, single buffered']
    #allocation5 [shape = 's32[1]{0}', space=sflag, size = 0x4, scoped, tag = 'scoped memory for meta_decoder_rnn_sequence.1']
    #allocation6 [shape = 's32[1]{0}', space=sflag, size = 0x4, scoped, tag = 'scoped memory for meta_decoder_rnn_sequence.1']
    #allocation7 [shape = 'u8[2048]{0}', space=vmem, size = 0x800, scoped, tag = 'output window, operand 1, single buffered']
    #allocation8 [shape = 'u8[2048]{0}', space=vmem, size = 0x800, scoped, tag = 'output window, operand 2, single buffered']
    #allocation9 [shape = 's32[1]{0}', space=sflag, size = 0x4, scoped, tag = 'scoped memory for meta_decoder_rnn_sequence.1']
    %12 = vsyncpa [#allocation5], 0
    %13 = vsyncpa [#allocation6], 0
    %14 = vsyncpa [#allocation9], 0
    // Predicated region
    $region2: #{meta_decoder_rnn_sequence.1} parent=1 // pred_check
      _
    $region3: #{meta_decoder_rnn_sequence.1} parent=1 // pred_check_branch
      %16 = sbr.rel (0) target = $region5
    $region4: #{meta_decoder_rnn_sequence.1} parent=1 // pred_region
      _
    $region5: #{meta_decoder_rnn_sequence.1} parent=1 // pred_fallthru
      _
    // Predicated region
    $region6: #{meta_decoder_rnn_sequence.1} parent=1 // pred_check
      _
    $region7: #{meta_decoder_rnn_sequence.1} parent=1 // pred_check_branch
      %18 = sbr.rel (0) target = $region9
    $region8: #{meta_decoder_rnn_sequence.1} parent=1 // pred_region
      _
    $region9: #{meta_decoder_rnn_sequence.1} parent=1 // pred_fallthru
      _
    // Predicated region
    $region10: #{meta_decoder_rnn_sequence.1} parent=1 // pred_check
      _
    $region11: #{meta_decoder_rnn_sequence.1} parent=1 // pred_check_branch
      %20 = sbr.rel (0) target = $region13
    $region12: #{meta_decoder_rnn_sequence.1} parent=1 // pred_region
      _
    $region13: #{meta_decoder_rnn_sequence.1} parent=1 // pred_fallthru
      _
    // Predicated region
    $region14: #{meta_decoder_rnn_sequence.1} parent=1 // pred_check
      _
    $region15: #{meta_decoder_rnn_sequence.1} parent=1 // pred_check_branch
      %22 = sbr.rel (0) target = $region17
    $region16: #{meta_decoder_rnn_sequence.1} parent=1 // pred_region
      %s24 = ssub.s32 896, 896
      %25 = vsyncadd [#allocation5], %s24
      %s26 = sshll.u32 [#allocation4], 4
      %s27 = int_to_ptr.vmem [resolvable:$true] %s26
      %32 = dma.hbm_to_vmem [thread:$0]  %s3, 896, %s27, [#allocation5], 128, 128, 8
    $region17: #{meta_decoder_rnn_sequence.1} parent=1 // pred_fallthru
      _
    // Predicated region
    $region18: #{meta_decoder_rnn_sequence.1} parent=1 // pred_check
      _
    $region19: #{meta_decoder_rnn_sequence.1} parent=1 // pred_check_branch
      %34 = sbr.rel (0) target = $region21
    $region20: #{meta_decoder_rnn_sequence.1} parent=1 // pred_region
      %35 = dma.done [#allocation5], 896
    $region21: #{meta_decoder_rnn_sequence.1} parent=1 // pred_fallthru
      _
    %v36 = vld [vmem:[#allocation4 + $0x30] sm:$0x1]
    %v37 = vld [vmem:[#allocation4 + $0x8] sm:$0xff]
    %v38 = vld [vmem:[#allocation4 + $0x10] sm:$0xff]
    %v39 = vld [vmem:[#allocation4 + $0x18] sm:$0xff]
    %v40 = vld [vmem:[#allocation4 + $0x31] sm:$0x1]
    %v41 = vld [vmem:[#allocation4 + $0x20] sm:$0xff]
    %v42 = vld [vmem:[#allocation4 + $0x28] sm:$0xff]
    %v43 = vld [vmem:[#allocation4 + $0x32] sm:$0x1]
    %v44 = vld [vmem:[%s0] sm:$0xff]
    %v45 = vld [vmem:[%s0 + $0x8] sm:$0xff]
    %v46 = vld [vmem:[%s0 + $0x10] sm:$0xff]
    %v47 = vld [vmem:[%s0 + $0x18] sm:$0xff]
    %v48 = vld [vmem:[#allocation4] sm:$0x1]
    %50 = vset.pattern.permute.xlu0 0
    %51 = vperm.xlu0 %50, %v44
    %v52 = vpop.permute.xlu0 %51
    %55 = vset.pattern.permute.xlu0 0
    %56 = vperm.xlu0 %55, %v45
    %v57 = vpop.permute.xlu0 %56
    %60 = vset.pattern.permute.xlu0 0
    %61 = vperm.xlu0 %60, %v46
    %v62 = vpop.permute.xlu0 %61
    %65 = vset.pattern.permute.xlu0 0
    %66 = vperm.xlu0 %65, %v47
    %v67 = vpop.permute.xlu0 %66
    %v69 = vlaneseq
    %v70 = vshrl.u32 %v69, 7
    %v71 = vsub.s32 0, %v70
    %v72 = vrot.slane %v48, %v71
    %v73 = vmul.f32 %v52, %v72
    %v74 = vmul.f32 %v57, %v72
    %v75 = vmul.f32 %v62, %v72
    %v76 = vmul.f32 %v67, %v72
    %v77 = vlaneseq
    %v78 = vshrl.u32 %v77, 7
    %v79 = vsub.s32 0, %v78
    %v80 = vrot.slane %v36, %v79
    %v81 = vadd.f32 %v80, %v73
    %v82 = vadd.f32 %v80, %v74
    %v83 = vadd.f32 %v80, %v75
    %v84 = vadd.f32 %v80, %v76
    %v85 = vld [vmem:[#allocation4 + $0x1] sm:$0x1]
    %86 = vset.pattern.permute.xlu0 1
    %87 = vperm.xlu0 %86, %v44
    %v88 = vpop.permute.xlu0 %87
    %90 = vset.pattern.permute.xlu0 1
    %91 = vperm.xlu0 %90, %v45
    %v92 = vpop.permute.xlu0 %91
    %94 = vset.pattern.permute.xlu0 1
    %95 = vperm.xlu0 %94, %v46
    %v96 = vpop.permute.xlu0 %95
    %98 = vset.pattern.permute.xlu0 1
    %99 = vperm.xlu0 %98, %v47
    %v100 = vpop.permute.xlu0 %99
    %v102 = vlaneseq
    %v103 = vshrl.u32 %v102, 7
    %v104 = vsub.s32 0, %v103
    %v105 = vrot.slane %v85, %v104
    %v106 = vmul.f32 %v88, %v105
    %v107 = vmul.f32 %v92, %v105
    %v108 = vmul.f32 %v96, %v105
    %v109 = vmul.f32 %v100, %v105
    %v110 = vadd.f32 %v81, %v106
    %v111 = vadd.f32 %v82, %v107
    %v112 = vadd.f32 %v83, %v108
    %v113 = vadd.f32 %v84, %v109
    %v114 = vmax.f32 %v110, 0.0
    %v115 = vmax.f32 %v111, 0.0
    %v116 = vmax.f32 %v112, 0.0
    %v117 = vmax.f32 %v113, 0.0
    %v118 = vlaneseq
    %v119 = vshrl.u32 %v118, 7
    %v120 = vsub.s32 0, %v119
    %v121 = vrot.slane %v40, %v120
    %vm122 = vcmask 64512
    %v124 = vsel %vm122, %v114, 0
    %v127 = vsel %vm122, %v115, 0
    %v130 = vsel %vm122, %v116, 0
    %v133 = vsel %vm122, %v117, 0
    %135 = vmatprep.subr.mxu0 0.0
    %136 = vmatpush1.msra.mxu0 %v37
    %137 = vmatprep.subr.mxu0 0.0
    %138 = vmatpush1.msra.mxu0 0.0
    %139 = vmatprep.subr.mxu0 0.0
    %140 = vmatpush1.msra.mxu0 0.0
    %141 = vmatprep.subr.mxu0 0.0
    %142 = vmatpush1.msra.mxu0 0.0
    %143 = vmatprep.subr.mxu0 0.0
    %144 = vmatpush1.msra.mxu0 0.0
    %145 = vmatprep.subr.mxu0 0.0
    %146 = vmatpush1.msra.mxu0 0.0
    %147 = vmatprep.subr.mxu0 0.0
    %148 = vmatpush1.msra.mxu0 0.0
    %149 = vmatprep.subr.mxu0 0.0
    %150 = vmatpush1.msra.mxu0 0.0
    %151 = vmatprep.subr.mxu0 0.0
    %152 = vmatpush1.msra.mxu0 0.0
    %153 = vmatprep.subr.mxu0 0.0
    %154 = vmatpush1.msra.mxu0 0.0
    %155 = vmatprep.subr.mxu0 0.0
    %156 = vmatpush1.msra.mxu0 0.0
    %157 = vmatprep.subr.mxu0 0.0
    %158 = vmatpush1.msra.mxu0 0.0
    %159 = vmatprep.subr.mxu0 0.0
    %160 = vmatpush1.msra.mxu0 0.0
    %161 = vmatprep.subr.mxu0 0.0
    %162 = vmatpush1.msra.mxu0 0.0
    %163 = vmatprep.subr.mxu0 0.0
    %164 = vmatpush1.msra.mxu0 0.0
    %165 = vmatprep.subr.mxu0 0.0
    %166 = vmatpush1.msra.mxu0 0.0
    %167 = vmatprep.subr.mxu0 0.0
    %168 = vmatpush1.msra.mxu0 0.0
    %169 = vmatprep.subr.mxu0 0.0
    %170 = vmatpush1.msra.mxu0 0.0
    %171 = vmatprep.subr.mxu0 0.0
    %172 = vmatpush1.msra.mxu0 0.0
    %173 = vmatprep.subr.mxu0 0.0
    %174 = vmatpush1.msra.mxu0 0.0
    %175 = vmatprep.subr.mxu0 0.0
    %176 = vmatpush1.msra.mxu0 0.0
    %177 = vmatprep.subr.mxu0 0.0
    %178 = vmatpush1.msra.mxu0 0.0
    %179 = vmatprep.subr.mxu0 0.0
    %180 = vmatpush1.msra.mxu0 0.0
    %181 = vmatprep.subr.mxu0 0.0
    %182 = vmatpush1.msra.mxu0 0.0
    %183 = vmatprep.subr.mxu0 0.0
    %184 = vmatpush1.msra.mxu0 0.0
    %185 = vmatprep.subr.mxu0 0.0
    %186 = vmatpush1.msra.mxu0 0.0
    %187 = vmatprep.subr.mxu0 0.0
    %188 = vmatpush1.msra.mxu0 0.0
    %189 = vmatprep.subr.mxu0 0.0
    %190 = vmatpush1.msra.mxu0 0.0
    %191 = vmatprep.subr.mxu0 0.0
    %192 = vmatpush1.msra.mxu0 0.0
    %193 = vmatprep.subr.mxu0 0.0
    %194 = vmatpush1.msra.mxu0 0.0
    %195 = vmatprep.subr.mxu0 0.0
    %196 = vmatpush1.msra.mxu0 0.0
    %197 = vmatprep.subr.mxu0 0.0
    %198 = vmatpush1.msra.mxu0 0.0
    %199 = vmatprep.mubr.f32.mxu0 0.0
    %200 = vmatmul.mubr.f32.gmra.mrb[0].mxu0 %v124
    %v201 = vpop.f32.mrb[0].mxu0
    %v202 = vadd.f32 %v121, %v201
    %v203 = vpop.f32.mrb[0].mxu0
    %204 = vmatprep.mubr.f32.mxu0 0.0
    %205 = vmatmul.mubr.f32.gmra.mrb[0].mxu0 %v127
    %v206 = vpop.f32.mrb[0].mxu0
    %v207 = vadd.f32 %v121, %v206
    %v208 = vpop.f32.mrb[0].mxu0
    %209 = vmatprep.mubr.f32.mxu0 0.0
    %210 = vmatmul.mubr.f32.gmra.mrb[0].mxu0 %v130
    %v211 = vpop.f32.mrb[0].mxu0
    %v212 = vadd.f32 %v121, %v211
    %v213 = vpop.f32.mrb[0].mxu0
    %214 = vmatprep.mubr.f32.mxu0 0.0
    %215 = vmatmul.mubr.f32.gmra.mrb[0].mxu0 %v133
    %v216 = vpop.f32.mrb[0].mxu0
    %v217 = vadd.f32 %v121, %v216
    %v218 = vpop.f32.mrb[0].mxu0
    %219 = vdwg.mxu0
    %vm220 = vcmask 523264
    %221 = vst.msk [vmem:[#allocation2] sm:$0xff] %vm220, %v202
    %222 = vst.msk [vmem:[#allocation2 + $0x8] sm:$0xff] %vm220, %v207
    %223 = vst.msk [vmem:[#allocation2 + $0x10] sm:$0xff] %vm220, %v212
    %224 = vst.msk [vmem:[#allocation2 + $0x18] sm:$0xff] %vm220, %v217
    %v225 = vld [vmem:[%s1] sm:$0xf]
    %v226 = vld [vmem:[%s2] sm:$0xf]
    %v227 = vld [vmem:[#allocation2] sm:$0xf]
    %vm228 = vcmask 130048
    %v230 = vsel %vm228, %v225, 0
    %232 = vmatprep.subr.mxu0 0.0
    %233 = vmatpush1.msra.mxu0 %v38
    %234 = vmatprep.subr.mxu0 0.0
    %235 = vmatpush1.msra.mxu0 %v39
    %236 = vmatprep.subr.mxu0 0.0
    %237 = vmatpush1.msra.mxu0 0.0
    %238 = vmatprep.subr.mxu0 0.0
    %239 = vmatpush1.msra.mxu0 0.0
    %240 = vmatprep.subr.mxu0 0.0
    %241 = vmatpush1.msra.mxu0 0.0
    %242 = vmatprep.subr.mxu0 0.0
    %243 = vmatpush1.msra.mxu0 0.0
    %244 = vmatprep.subr.mxu0 0.0
    %245 = vmatpush1.msra.mxu0 0.0
    %246 = vmatprep.subr.mxu0 0.0
    %247 = vmatpush1.msra.mxu0 0.0
    %248 = vmatprep.subr.mxu0 0.0
    %249 = vmatpush1.msra.mxu0 0.0
    %250 = vmatprep.subr.mxu0 0.0
    %251 = vmatpush1.msra.mxu0 0.0
    %252 = vmatprep.subr.mxu0 0.0
    %253 = vmatpush1.msra.mxu0 0.0
    %254 = vmatprep.subr.mxu0 0.0
    %255 = vmatpush1.msra.mxu0 0.0
    %256 = vmatprep.subr.mxu0 0.0
    %257 = vmatpush1.msra.mxu0 0.0
    %258 = vmatprep.subr.mxu0 0.0
    %259 = vmatpush1.msra.mxu0 0.0
    %260 = vmatprep.subr.mxu0 0.0
    %261 = vmatpush1.msra.mxu0 0.0
    %262 = vmatprep.subr.mxu0 0.0
    %263 = vmatpush1.msra.mxu0 0.0
    %264 = vmatprep.subr.mxu0 0.0
    %265 = vmatpush1.msra.mxu0 0.0
    %266 = vmatprep.subr.mxu0 0.0
    %267 = vmatpush1.msra.mxu0 0.0
    %268 = vmatprep.subr.mxu0 0.0
    %269 = vmatpush1.msra.mxu0 0.0
    %270 = vmatprep.subr.mxu0 0.0
    %271 = vmatpush1.msra.mxu0 0.0
    %272 = vmatprep.subr.mxu0 0.0
    %273 = vmatpush1.msra.mxu0 0.0
    %274 = vmatprep.subr.mxu0 0.0
    %275 = vmatpush1.msra.mxu0 0.0
    %276 = vmatprep.subr.mxu0 0.0
    %277 = vmatpush1.msra.mxu0 0.0
    %278 = vmatprep.subr.mxu0 0.0
    %279 = vmatpush1.msra.mxu0 0.0
    %280 = vmatprep.subr.mxu0 0.0
    %281 = vmatpush1.msra.mxu0 0.0
    %282 = vmatprep.subr.mxu0 0.0
    %283 = vmatpush1.msra.mxu0 0.0
    %284 = vmatprep.subr.mxu0 0.0
    %285 = vmatpush1.msra.mxu0 0.0
    %286 = vmatprep.subr.mxu0 0.0
    %287 = vmatpush1.msra.mxu0 0.0
    %288 = vmatprep.subr.mxu0 0.0
    %289 = vmatpush1.msra.mxu0 0.0
    %290 = vmatprep.subr.mxu0 0.0
    %291 = vmatpush1.msra.mxu0 0.0
    %292 = vmatprep.subr.mxu0 0.0
    %293 = vmatpush1.msra.mxu0 0.0
    %294 = vmatprep.subr.mxu0 0.0
    %295 = vmatpush1.msra.mxu0 0.0
    %296 = vmatprep.mubr.f32.mxu0 0.0
    %297 = vmatmul.mubr.f32.gmra.mrb[0].mxu0 %v230
    %v298 = vpop.f32.mrb[0].mxu0
    %v299 = vadd.f32 0.0, %v298
    %v300 = vpop.f32.mrb[0].mxu0
    %301 = vdwg.mxu0
    %v302 = vadd.f32 %v227, %v299
    %v303 = vxor.u32 %v302, 2147483648
    %v304 = vmul.f32 %v303, 1.442695
    %v305 = vpow.pop %v304
    %v306 = vadd.f32 %v305, 1.0
    %v307 = vrcp.pop %v306
    %v308 = vmul.f32 1.0, %v307
    %v309 = vtanh.pop %v302
    %311 = vrot.lane.b32.xlu0 %v308, 112
    %v312 = vpop.permute.xlu0 %311
    %v314 = vmul.f32 %v226, %v312
    %316 = vrot.lane.b32.xlu0 %v309, 80
    %v317 = vpop.permute.xlu0 %316
    %v319 = vmul.f32 %v308, %v317
    %v320 = vadd.f32 %v314, %v319
    %v321 = vtanh.pop %v320
    %323 = vrot.lane.b32.xlu0 %v321, 32
    %v324 = vpop.permute.xlu0 %323
    %v326 = vmul.f32 %v308, %v324
    %328 = vrot.lane.b32.xlu0 %v326, 96
    %v329 = vpop.permute.xlu0 %328
    %vm331 = vcmask 125952
    %332 = vst.msk [vmem:[#allocation3] sm:$0xf] %vm331, %v329
    %v333 = vld [vmem:[#allocation2 + $0x4] sm:$0xf]
    %v334 = vsel %vm228, %v329, 0
    %336 = vmatprep.subr.mxu0 0.0
    %337 = vmatpush1.msra.mxu0 %v38
    %338 = vmatprep.subr.mxu0 0.0
    %339 = vmatpush1.msra.mxu0 %v39
    %340 = vmatprep.subr.mxu0 0.0
    %341 = vmatpush1.msra.mxu0 0.0
    %342 = vmatprep.subr.mxu0 0.0
    %343 = vmatpush1.msra.mxu0 0.0
    %344 = vmatprep.subr.mxu0 0.0
    %345 = vmatpush1.msra.mxu0 0.0
    %346 = vmatprep.subr.mxu0 0.0
    %347 = vmatpush1.msra.mxu0 0.0
    %348 = vmatprep.subr.mxu0 0.0
    %349 = vmatpush1.msra.mxu0 0.0
    %350 = vmatprep.subr.mxu0 0.0
    %351 = vmatpush1.msra.mxu0 0.0
    %352 = vmatprep.subr.mxu0 0.0
    %353 = vmatpush1.msra.mxu0 0.0
    %354 = vmatprep.subr.mxu0 0.0
    %355 = vmatpush1.msra.mxu0 0.0
    %356 = vmatprep.subr.mxu0 0.0
    %357 = vmatpush1.msra.mxu0 0.0
    %358 = vmatprep.subr.mxu0 0.0
    %359 = vmatpush1.msra.mxu0 0.0
    %360 = vmatprep.subr.mxu0 0.0
    %361 = vmatpush1.msra.mxu0 0.0
    %362 = vmatprep.subr.mxu0 0.0
    %363 = vmatpush1.msra.mxu0 0.0
    %364 = vmatprep.subr.mxu0 0.0
    %365 = vmatpush1.msra.mxu0 0.0
    %366 = vmatprep.subr.mxu0 0.0
    %367 = vmatpush1.msra.mxu0 0.0
    %368 = vmatprep.subr.mxu0 0.0
    %369 = vmatpush1.msra.mxu0 0.0
    %370 = vmatprep.subr.mxu0 0.0
    %371 = vmatpush1.msra.mxu0 0.0
    %372 = vmatprep.subr.mxu0 0.0
    %373 = vmatpush1.msra.mxu0 0.0
    %374 = vmatprep.subr.mxu0 0.0
    %375 = vmatpush1.msra.mxu0 0.0
    %376 = vmatprep.subr.mxu0 0.0
    %377 = vmatpush1.msra.mxu0 0.0
    %378 = vmatprep.subr.mxu0 0.0
    %379 = vmatpush1.msra.mxu0 0.0
    %380 = vmatprep.subr.mxu0 0.0
    %381 = vmatpush1.msra.mxu0 0.0
    %382 = vmatprep.subr.mxu0 0.0
    %383 = vmatpush1.msra.mxu0 0.0
    %384 = vmatprep.subr.mxu0 0.0
    %385 = vmatpush1.msra.mxu0 0.0
    %386 = vmatprep.subr.mxu0 0.0
    %387 = vmatpush1.msra.mxu0 0.0
    %388 = vmatprep.subr.mxu0 0.0
    %389 = vmatpush1.msra.mxu0 0.0
    %390 = vmatprep.subr.mxu0 0.0
    %391 = vmatpush1.msra.mxu0 0.0
    %392 = vmatprep.subr.mxu0 0.0
    %393 = vmatpush1.msra.mxu0 0.0
    %394 = vmatprep.subr.mxu0 0.0
    %395 = vmatpush1.msra.mxu0 0.0
    %396 = vmatprep.subr.mxu0 0.0
    %397 = vmatpush1.msra.mxu0 0.0
    %398 = vmatprep.subr.mxu0 0.0
    %399 = vmatpush1.msra.mxu0 0.0
    %400 = vmatprep.mubr.f32.mxu0 0.0
    %401 = vmatmul.mubr.f32.gmra.mrb[0].mxu0 %v334
    %v402 = vpop.f32.mrb[0].mxu0
    %v403 = vadd.f32 0.0, %v402
    %v404 = vpop.f32.mrb[0].mxu0
    %405 = vdwg.mxu0
    %v406 = vadd.f32 %v333, %v403
    %v407 = vxor.u32 %v406, 2147483648
    %v408 = vmul.f32 %v407, 1.442695
    %v409 = vpow.pop %v408
    %v410 = vadd.f32 %v409, 1.0
    %v411 = vrcp.pop %v410
    %v412 = vmul.f32 1.0, %v411
    %v413 = vtanh.pop %v406
    %415 = vrot.lane.b32.xlu0 %v412, 112
    %v416 = vpop.permute.xlu0 %415
    %v418 = vmul.f32 %v320, %v416
    %420 = vrot.lane.b32.xlu0 %v413, 80
    %v421 = vpop.permute.xlu0 %420
    %v423 = vmul.f32 %v412, %v421
    %v424 = vadd.f32 %v418, %v423
    %v425 = vtanh.pop %v424
    %427 = vrot.lane.b32.xlu0 %v425, 32
    %v428 = vpop.permute.xlu0 %427
    %v430 = vmul.f32 %v412, %v428
    %432 = vrot.lane.b32.xlu0 %v430, 96
    %v433 = vpop.permute.xlu0 %432
    %435 = vst.msk [vmem:[#allocation3 + $0x4] sm:$0xf] %vm331, %v433
    %v436 = vld [vmem:[#allocation2 + $0x8] sm:$0xf]
    %v437 = vsel %vm228, %v433, 0
    %439 = vmatprep.subr.mxu0 0.0
    %440 = vmatpush1.msra.mxu0 %v38
    %441 = vmatprep.subr.mxu0 0.0
    %442 = vmatpush1.msra.mxu0 %v39
    %443 = vmatprep.subr.mxu0 0.0
    %444 = vmatpush1.msra.mxu0 0.0
    %445 = vmatprep.subr.mxu0 0.0
    %446 = vmatpush1.msra.mxu0 0.0
    %447 = vmatprep.subr.mxu0 0.0
    %448 = vmatpush1.msra.mxu0 0.0
    %449 = vmatprep.subr.mxu0 0.0
    %450 = vmatpush1.msra.mxu0 0.0
    %451 = vmatprep.subr.mxu0 0.0
    %452 = vmatpush1.msra.mxu0 0.0
    %453 = vmatprep.subr.mxu0 0.0
    %454 = vmatpush1.msra.mxu0 0.0
    %455 = vmatprep.subr.mxu0 0.0
    %456 = vmatpush1.msra.mxu0 0.0
    %457 = vmatprep.subr.mxu0 0.0
    %458 = vmatpush1.msra.mxu0 0.0
    %459 = vmatprep.subr.mxu0 0.0
    %460 = vmatpush1.msra.mxu0 0.0
    %461 = vmatprep.subr.mxu0 0.0
    %462 = vmatpush1.msra.mxu0 0.0
    %463 = vmatprep.subr.mxu0 0.0
    %464 = vmatpush1.msra.mxu0 0.0
    %465 = vmatprep.subr.mxu0 0.0
    %466 = vmatpush1.msra.mxu0 0.0
    %467 = vmatprep.subr.mxu0 0.0
    %468 = vmatpush1.msra.mxu0 0.0
    %469 = vmatprep.subr.mxu0 0.0
    %470 = vmatpush1.msra.mxu0 0.0
    %471 = vmatprep.subr.mxu0 0.0
    %472 = vmatpush1.msra.mxu0 0.0
    %473 = vmatprep.subr.mxu0 0.0
    %474 = vmatpush1.msra.mxu0 0.0
    %475 = vmatprep.subr.mxu0 0.0
    %476 = vmatpush1.msra.mxu0 0.0
    %477 = vmatprep.subr.mxu0 0.0
    %478 = vmatpush1.msra.mxu0 0.0
    %479 = vmatprep.subr.mxu0 0.0
    %480 = vmatpush1.msra.mxu0 0.0
    %481 = vmatprep.subr.mxu0 0.0
    %482 = vmatpush1.msra.mxu0 0.0
    %483 = vmatprep.subr.mxu0 0.0
    %484 = vmatpush1.msra.mxu0 0.0
    %485 = vmatprep.subr.mxu0 0.0
    %486 = vmatpush1.msra.mxu0 0.0
    %487 = vmatprep.subr.mxu0 0.0
    %488 = vmatpush1.msra.mxu0 0.0
    %489 = vmatprep.subr.mxu0 0.0
    %490 = vmatpush1.msra.mxu0 0.0
    %491 = vmatprep.subr.mxu0 0.0
    %492 = vmatpush1.msra.mxu0 0.0
    %493 = vmatprep.subr.mxu0 0.0
    %494 = vmatpush1.msra.mxu0 0.0
    %495 = vmatprep.subr.mxu0 0.0
    %496 = vmatpush1.msra.mxu0 0.0
    %497 = vmatprep.subr.mxu0 0.0
    %498 = vmatpush1.msra.mxu0 0.0
    %499 = vmatprep.subr.mxu0 0.0
    %500 = vmatpush1.msra.mxu0 0.0
    %501 = vmatprep.subr.mxu0 0.0
    %502 = vmatpush1.msra.mxu0 0.0
    %503 = vmatprep.mubr.f32.mxu0 0.0
    %504 = vmatmul.mubr.f32.gmra.mrb[0].mxu0 %v437
    %v505 = vpop.f32.mrb[0].mxu0
    %v506 = vadd.f32 0.0, %v505
    %v507 = vpop.f32.mrb[0].mxu0
    %508 = vdwg.mxu0
    %v509 = vadd.f32 %v436, %v506
    %v510 = vxor.u32 %v509, 2147483648
    %v511 = vmul.f32 %v510, 1.442695
    %v512 = vpow.pop %v511
    %v513 = vadd.f32 %v512, 1.0
    %v514 = vrcp.pop %v513
    %v515 = vmul.f32 1.0, %v514
    %v516 = vtanh.pop %v509
    %518 = vrot.lane.b32.xlu0 %v515, 112
    %v519 = vpop.permute.xlu0 %518
    %v521 = vmul.f32 %v424, %v519
    %523 = vrot.lane.b32.xlu0 %v516, 80
    %v524 = vpop.permute.xlu0 %523
    %v526 = vmul.f32 %v515, %v524
    %v527 = vadd.f32 %v521, %v526
    %v528 = vtanh.pop %v527
    %530 = vrot.lane.b32.xlu0 %v528, 32
    %v531 = vpop.permute.xlu0 %530
    %v533 = vmul.f32 %v515, %v531
    %535 = vrot.lane.b32.xlu0 %v533, 96
    %v536 = vpop.permute.xlu0 %535
    %538 = vst.msk [vmem:[#allocation3 + $0x8] sm:$0xf] %vm331, %v536
    %v539 = vld [vmem:[#allocation2 + $0xc] sm:$0xf]
    %v540 = vsel %vm228, %v536, 0
    %542 = vmatprep.subr.mxu0 0.0
    %543 = vmatpush1.msra.mxu0 %v38
    %544 = vmatprep.subr.mxu0 0.0
    %545 = vmatpush1.msra.mxu0 %v39
    %546 = vmatprep.subr.mxu0 0.0
    %547 = vmatpush1.msra.mxu0 0.0
    %548 = vmatprep.subr.mxu0 0.0
    %549 = vmatpush1.msra.mxu0 0.0
    %550 = vmatprep.subr.mxu0 0.0
    %551 = vmatpush1.msra.mxu0 0.0
    %552 = vmatprep.subr.mxu0 0.0
    %553 = vmatpush1.msra.mxu0 0.0
    %554 = vmatprep.subr.mxu0 0.0
    %555 = vmatpush1.msra.mxu0 0.0
    %556 = vmatprep.subr.mxu0 0.0
    %557 = vmatpush1.msra.mxu0 0.0
    %558 = vmatprep.subr.mxu0 0.0
    %559 = vmatpush1.msra.mxu0 0.0
    %560 = vmatprep.subr.mxu0 0.0
    %561 = vmatpush1.msra.mxu0 0.0
    %562 = vmatprep.subr.mxu0 0.0
    %563 = vmatpush1.msra.mxu0 0.0
    %564 = vmatprep.subr.mxu0 0.0
    %565 = vmatpush1.msra.mxu0 0.0
    %566 = vmatprep.subr.mxu0 0.0
    %567 = vmatpush1.msra.mxu0 0.0
    %568 = vmatprep.subr.mxu0 0.0
    %569 = vmatpush1.msra.mxu0 0.0
    %570 = vmatprep.subr.mxu0 0.0
    %571 = vmatpush1.msra.mxu0 0.0
    %572 = vmatprep.subr.mxu0 0.0
    %573 = vmatpush1.msra.mxu0 0.0
    %574 = vmatprep.subr.mxu0 0.0
    %575 = vmatpush1.msra.mxu0 0.0
    %576 = vmatprep.subr.mxu0 0.0
    %577 = vmatpush1.msra.mxu0 0.0
    %578 = vmatprep.subr.mxu0 0.0
    %579 = vmatpush1.msra.mxu0 0.0
    %580 = vmatprep.subr.mxu0 0.0
    %581 = vmatpush1.msra.mxu0 0.0
    %582 = vmatprep.subr.mxu0 0.0
    %583 = vmatpush1.msra.mxu0 0.0
    %584 = vmatprep.subr.mxu0 0.0
    %585 = vmatpush1.msra.mxu0 0.0
    %586 = vmatprep.subr.mxu0 0.0
    %587 = vmatpush1.msra.mxu0 0.0
    %588 = vmatprep.subr.mxu0 0.0
    %589 = vmatpush1.msra.mxu0 0.0
    %590 = vmatprep.subr.mxu0 0.0
    %591 = vmatpush1.msra.mxu0 0.0
    %592 = vmatprep.subr.mxu0 0.0
    %593 = vmatpush1.msra.mxu0 0.0
    %594 = vmatprep.subr.mxu0 0.0
    %595 = vmatpush1.msra.mxu0 0.0
    %596 = vmatprep.subr.mxu0 0.0
    %597 = vmatpush1.msra.mxu0 0.0
    %598 = vmatprep.subr.mxu0 0.0
    %599 = vmatpush1.msra.mxu0 0.0
    %600 = vmatprep.subr.mxu0 0.0
    %601 = vmatpush1.msra.mxu0 0.0
    %602 = vmatprep.subr.mxu0 0.0
    %603 = vmatpush1.msra.mxu0 0.0
    %604 = vmatprep.subr.mxu0 0.0
    %605 = vmatpush1.msra.mxu0 0.0
    %606 = vmatprep.mubr.f32.mxu0 0.0
    %607 = vmatmul.mubr.f32.gmra.mrb[0].mxu0 %v540
    %v608 = vpop.f32.mrb[0].mxu0
    %v609 = vadd.f32 0.0, %v608
    %v610 = vpop.f32.mrb[0].mxu0
    %611 = vdwg.mxu0
    %v612 = vadd.f32 %v539, %v609
    %v613 = vxor.u32 %v612, 2147483648
    %v614 = vmul.f32 %v613, 1.442695
    %v615 = vpow.pop %v614
    %v616 = vadd.f32 %v615, 1.0
    %v617 = vrcp.pop %v616
    %v618 = vmul.f32 1.0, %v617
    %v619 = vtanh.pop %v612
    %621 = vrot.lane.b32.xlu0 %v618, 112
    %v622 = vpop.permute.xlu0 %621
    %v624 = vmul.f32 %v527, %v622
    %626 = vrot.lane.b32.xlu0 %v619, 80
    %v627 = vpop.permute.xlu0 %626
    %v629 = vmul.f32 %v618, %v627
    %v630 = vadd.f32 %v624, %v629
    %v631 = vtanh.pop %v630
    %633 = vrot.lane.b32.xlu0 %v631, 32
    %v634 = vpop.permute.xlu0 %633
    %v636 = vmul.f32 %v618, %v634
    %638 = vrot.lane.b32.xlu0 %v636, 96
    %v639 = vpop.permute.xlu0 %638
    %641 = vst.msk [vmem:[#allocation3 + $0xc] sm:$0xf] %vm331, %v639
    %v642 = vld [vmem:[#allocation2 + $0x10] sm:$0xf]
    %v643 = vsel %vm228, %v639, 0
    %645 = vmatprep.subr.mxu0 0.0
    %646 = vmatpush1.msra.mxu0 %v38
    %647 = vmatprep.subr.mxu0 0.0
    %648 = vmatpush1.msra.mxu0 %v39
    %649 = vmatprep.subr.mxu0 0.0
    %650 = vmatpush1.msra.mxu0 0.0
    %651 = vmatprep.subr.mxu0 0.0
    %652 = vmatpush1.msra.mxu0 0.0
    %653 = vmatprep.subr.mxu0 0.0
    %654 = vmatpush1.msra.mxu0 0.0
    %655 = vmatprep.subr.mxu0 0.0
    %656 = vmatpush1.msra.mxu0 0.0
    %657 = vmatprep.subr.mxu0 0.0
    %658 = vmatpush1.msra.mxu0 0.0
    %659 = vmatprep.subr.mxu0 0.0
    %660 = vmatpush1.msra.mxu0 0.0
    %661 = vmatprep.subr.mxu0 0.0
    %662 = vmatpush1.msra.mxu0 0.0
    %663 = vmatprep.subr.mxu0 0.0
    %664 = vmatpush1.msra.mxu0 0.0
    %665 = vmatprep.subr.mxu0 0.0
    %666 = vmatpush1.msra.mxu0 0.0
    %667 = vmatprep.subr.mxu0 0.0
    %668 = vmatpush1.msra.mxu0 0.0
    %669 = vmatprep.subr.mxu0 0.0
    %670 = vmatpush1.msra.mxu0 0.0
    %671 = vmatprep.subr.mxu0 0.0
    %672 = vmatpush1.msra.mxu0 0.0
    %673 = vmatprep.subr.mxu0 0.0
    %674 = vmatpush1.msra.mxu0 0.0
    %675 = vmatprep.subr.mxu0 0.0
    %676 = vmatpush1.msra.mxu0 0.0
    %677 = vmatprep.subr.mxu0 0.0
    %678 = vmatpush1.msra.mxu0 0.0
    %679 = vmatprep.subr.mxu0 0.0
    %680 = vmatpush1.msra.mxu0 0.0
    %681 = vmatprep.subr.mxu0 0.0
    %682 = vmatpush1.msra.mxu0 0.0
    %683 = vmatprep.subr.mxu0 0.0
    %684 = vmatpush1.msra.mxu0 0.0
    %685 = vmatprep.subr.mxu0 0.0
    %686 = vmatpush1.msra.mxu0 0.0
    %687 = vmatprep.subr.mxu0 0.0
    %688 = vmatpush1.msra.mxu0 0.0
    %689 = vmatprep.subr.mxu0 0.0
    %690 = vmatpush1.msra.mxu0 0.0
    %691 = vmatprep.subr.mxu0 0.0
    %692 = vmatpush1.msra.mxu0 0.0
    %693 = vmatprep.subr.mxu0 0.0
    %694 = vmatpush1.msra.mxu0 0.0
    %695 = vmatprep.subr.mxu0 0.0
    %696 = vmatpush1.msra.mxu0 0.0
    %697 = vmatprep.subr.mxu0 0.0
    %698 = vmatpush1.msra.mxu0 0.0
    %699 = vmatprep.subr.mxu0 0.0
    %700 = vmatpush1.msra.mxu0 0.0
    %701 = vmatprep.subr.mxu0 0.0
    %702 = vmatpush1.msra.mxu0 0.0
    %703 = vmatprep.subr.mxu0 0.0
    %704 = vmatpush1.msra.mxu0 0.0
    %705 = vmatprep.subr.mxu0 0.0
    %706 = vmatpush1.msra.mxu0 0.0
    %707 = vmatprep.subr.mxu0 0.0
    %708 = vmatpush1.msra.mxu0 0.0
    %709 = vmatprep.mubr.f32.mxu0 0.0
    %710 = vmatmul.mubr.f32.gmra.mrb[0].mxu0 %v643
    %v711 = vpop.f32.mrb[0].mxu0
    %v712 = vadd.f32 0.0, %v711
    %v713 = vpop.f32.mrb[0].mxu0
    %714 = vdwg.mxu0
    %v715 = vadd.f32 %v642, %v712
    %v716 = vxor.u32 %v715, 2147483648
    %v717 = vmul.f32 %v716, 1.442695
    %v718 = vpow.pop %v717
    %v719 = vadd.f32 %v718, 1.0
    %v720 = vrcp.pop %v719
    %v721 = vmul.f32 1.0, %v720
    %v722 = vtanh.pop %v715
    %724 = vrot.lane.b32.xlu0 %v721, 112
    %v725 = vpop.permute.xlu0 %724
    %v727 = vmul.f32 %v630, %v725
    %729 = vrot.lane.b32.xlu0 %v722, 80
    %v730 = vpop.permute.xlu0 %729
    %v732 = vmul.f32 %v721, %v730
    %v733 = vadd.f32 %v727, %v732
    %v734 = vtanh.pop %v733
    %736 = vrot.lane.b32.xlu0 %v734, 32
    %v737 = vpop.permute.xlu0 %736
    %v739 = vmul.f32 %v721, %v737
    %741 = vrot.lane.b32.xlu0 %v739, 96
    %v742 = vpop.permute.xlu0 %741
    %744 = vst.msk [vmem:[#allocation3 + $0x10] sm:$0xf] %vm331, %v742
    %v745 = vld [vmem:[#allocation2 + $0x14] sm:$0xf]
    %v746 = vsel %vm228, %v742, 0
    %748 = vmatprep.subr.mxu0 0.0
    %749 = vmatpush1.msra.mxu0 %v38
    %750 = vmatprep.subr.mxu0 0.0
    %751 = vmatpush1.msra.mxu0 %v39
    %752 = vmatprep.subr.mxu0 0.0
    %753 = vmatpush1.msra.mxu0 0.0
    %754 = vmatprep.subr.mxu0 0.0
    %755 = vmatpush1.msra.mxu0 0.0
    %756 = vmatprep.subr.mxu0 0.0
    %757 = vmatpush1.msra.mxu0 0.0
    %758 = vmatprep.subr.mxu0 0.0
    %759 = vmatpush1.msra.mxu0 0.0
    %760 = vmatprep.subr.mxu0 0.0
    %761 = vmatpush1.msra.mxu0 0.0
    %762 = vmatprep.subr.mxu0 0.0
    %763 = vmatpush1.msra.mxu0 0.0
    %764 = vmatprep.subr.mxu0 0.0
    %765 = vmatpush1.msra.mxu0 0.0
    %766 = vmatprep.subr.mxu0 0.0
    %767 = vmatpush1.msra.mxu0 0.0
    %768 = vmatprep.subr.mxu0 0.0
    %769 = vmatpush1.msra.mxu0 0.0
    %770 = vmatprep.subr.mxu0 0.0
    %771 = vmatpush1.msra.mxu0 0.0
    %772 = vmatprep.subr.mxu0 0.0
    %773 = vmatpush1.msra.mxu0 0.0
    %774 = vmatprep.subr.mxu0 0.0
    %775 = vmatpush1.msra.mxu0 0.0
    %776 = vmatprep.subr.mxu0 0.0
    %777 = vmatpush1.msra.mxu0 0.0
    %778 = vmatprep.subr.mxu0 0.0
    %779 = vmatpush1.msra.mxu0 0.0
    %780 = vmatprep.subr.mxu0 0.0
    %781 = vmatpush1.msra.mxu0 0.0
    %782 = vmatprep.subr.mxu0 0.0
    %783 = vmatpush1.msra.mxu0 0.0
    %784 = vmatprep.subr.mxu0 0.0
    %785 = vmatpush1.msra.mxu0 0.0
    %786 = vmatprep.subr.mxu0 0.0
    %787 = vmatpush1.msra.mxu0 0.0
    %788 = vmatprep.subr.mxu0 0.0
    %789 = vmatpush1.msra.mxu0 0.0
    %790 = vmatprep.subr.mxu0 0.0
    %791 = vmatpush1.msra.mxu0 0.0
    %792 = vmatprep.subr.mxu0 0.0
    %793 = vmatpush1.msra.mxu0 0.0
    %794 = vmatprep.subr.mxu0 0.0
    %795 = vmatpush1.msra.mxu0 0.0
    %796 = vmatprep.subr.mxu0 0.0
    %797 = vmatpush1.msra.mxu0 0.0
    %798 = vmatprep.subr.mxu0 0.0
    %799 = vmatpush1.msra.mxu0 0.0
    %800 = vmatprep.subr.mxu0 0.0
    %801 = vmatpush1.msra.mxu0 0.0
    %802 = vmatprep.subr.mxu0 0.0
    %803 = vmatpush1.msra.mxu0 0.0
    %804 = vmatprep.subr.mxu0 0.0
    %805 = vmatpush1.msra.mxu0 0.0
    %806 = vmatprep.subr.mxu0 0.0
    %807 = vmatpush1.msra.mxu0 0.0
    %808 = vmatprep.subr.mxu0 0.0
    %809 = vmatpush1.msra.mxu0 0.0
    %810 = vmatprep.subr.mxu0 0.0
    %811 = vmatpush1.msra.mxu0 0.0
    %812 = vmatprep.mubr.f32.mxu0 0.0
    %813 = vmatmul.mubr.f32.gmra.mrb[0].mxu0 %v746
    %v814 = vpop.f32.mrb[0].mxu0
    %v815 = vadd.f32 0.0, %v814
    %v816 = vpop.f32.mrb[0].mxu0
    %817 = vdwg.mxu0
    %v818 = vadd.f32 %v745, %v815
    %v819 = vxor.u32 %v818, 2147483648
    %v820 = vmul.f32 %v819, 1.442695
    %v821 = vpow.pop %v820
    %v822 = vadd.f32 %v821, 1.0
    %v823 = vrcp.pop %v822
    %v824 = vmul.f32 1.0, %v823
    %v825 = vtanh.pop %v818
    %827 = vrot.lane.b32.xlu0 %v824, 112
    %v828 = vpop.permute.xlu0 %827
    %v830 = vmul.f32 %v733, %v828
    %832 = vrot.lane.b32.xlu0 %v825, 80
    %v833 = vpop.permute.xlu0 %832
    %v835 = vmul.f32 %v824, %v833
    %v836 = vadd.f32 %v830, %v835
    %v837 = vtanh.pop %v836
    %839 = vrot.lane.b32.xlu0 %v837, 32
    %v840 = vpop.permute.xlu0 %839
    %v842 = vmul.f32 %v824, %v840
    %844 = vrot.lane.b32.xlu0 %v842, 96
    %v845 = vpop.permute.xlu0 %844
    %847 = vst.msk [vmem:[#allocation3 + $0x14] sm:$0xf] %vm331, %v845
    %v848 = vld [vmem:[#allocation2 + $0x18] sm:$0xf]
    %v849 = vsel %vm228, %v845, 0
    %851 = vmatprep.subr.mxu0 0.0
    %852 = vmatpush1.msra.mxu0 %v38
    %853 = vmatprep.subr.mxu0 0.0
    %854 = vmatpush1.msra.mxu0 %v39
    %855 = vmatprep.subr.mxu0 0.0
    %856 = vmatpush1.msra.mxu0 0.0
    %857 = vmatprep.subr.mxu0 0.0
    %858 = vmatpush1.msra.mxu0 0.0
    %859 = vmatprep.subr.mxu0 0.0
    %860 = vmatpush1.msra.mxu0 0.0
    %861 = vmatprep.subr.mxu0 0.0
    %862 = vmatpush1.msra.mxu0 0.0
    %863 = vmatprep.subr.mxu0 0.0
    %864 = vmatpush1.msra.mxu0 0.0
    %865 = vmatprep.subr.mxu0 0.0
    %866 = vmatpush1.msra.mxu0 0.0
    %867 = vmatprep.subr.mxu0 0.0
    %868 = vmatpush1.msra.mxu0 0.0
    %869 = vmatprep.subr.mxu0 0.0
    %870 = vmatpush1.msra.mxu0 0.0
    %871 = vmatprep.subr.mxu0 0.0
    %872 = vmatpush1.msra.mxu0 0.0
    %873 = vmatprep.subr.mxu0 0.0
    %874 = vmatpush1.msra.mxu0 0.0
    %875 = vmatprep.subr.mxu0 0.0
    %876 = vmatpush1.msra.mxu0 0.0
    %877 = vmatprep.subr.mxu0 0.0
    %878 = vmatpush1.msra.mxu0 0.0
    %879 = vmatprep.subr.mxu0 0.0
    %880 = vmatpush1.msra.mxu0 0.0
    %881 = vmatprep.subr.mxu0 0.0
    %882 = vmatpush1.msra.mxu0 0.0
    %883 = vmatprep.subr.mxu0 0.0
    %884 = vmatpush1.msra.mxu0 0.0
    %885 = vmatprep.subr.mxu0 0.0
    %886 = vmatpush1.msra.mxu0 0.0
    %887 = vmatprep.subr.mxu0 0.0
    %888 = vmatpush1.msra.mxu0 0.0
    %889 = vmatprep.subr.mxu0 0.0
    %890 = vmatpush1.msra.mxu0 0.0
    %891 = vmatprep.subr.mxu0 0.0
    %892 = vmatpush1.msra.mxu0 0.0
    %893 = vmatprep.subr.mxu0 0.0
    %894 = vmatpush1.msra.mxu0 0.0
    %895 = vmatprep.subr.mxu0 0.0
    %896 = vmatpush1.msra.mxu0 0.0
    %897 = vmatprep.subr.mxu0 0.0
    %898 = vmatpush1.msra.mxu0 0.0
    %899 = vmatprep.subr.mxu0 0.0
    %900 = vmatpush1.msra.mxu0 0.0
    %901 = vmatprep.subr.mxu0 0.0
    %902 = vmatpush1.msra.mxu0 0.0
    %903 = vmatprep.subr.mxu0 0.0
    %904 = vmatpush1.msra.mxu0 0.0
    %905 = vmatprep.subr.mxu0 0.0
    %906 = vmatpush1.msra.mxu0 0.0
    %907 = vmatprep.subr.mxu0 0.0
    %908 = vmatpush1.msra.mxu0 0.0
    %909 = vmatprep.subr.mxu0 0.0
    %910 = vmatpush1.msra.mxu0 0.0
    %911 = vmatprep.subr.mxu0 0.0
    %912 = vmatpush1.msra.mxu0 0.0
    %913 = vmatprep.subr.mxu0 0.0
    %914 = vmatpush1.msra.mxu0 0.0
    %915 = vmatprep.mubr.f32.mxu0 0.0
    %916 = vmatmul.mubr.f32.gmra.mrb[0].mxu0 %v849
    %v917 = vpop.f32.mrb[0].mxu0
    %v918 = vadd.f32 0.0, %v917
    %v919 = vpop.f32.mrb[0].mxu0
    %920 = vdwg.mxu0
    %v921 = vadd.f32 %v848, %v918
    %v922 = vxor.u32 %v921, 2147483648
    %v923 = vmul.f32 %v922, 1.442695
    %v924 = vpow.pop %v923
    %v925 = vadd.f32 %v924, 1.0
    %v926 = vrcp.pop %v925
    %v927 = vmul.f32 1.0, %v926
    %v928 = vtanh.pop %v921
    %930 = vrot.lane.b32.xlu0 %v927, 112
    %v931 = vpop.permute.xlu0 %930
    %v933 = vmul.f32 %v836, %v931
    %935 = vrot.lane.b32.xlu0 %v928, 80
    %v936 = vpop.permute.xlu0 %935
    %v938 = vmul.f32 %v927, %v936
    %v939 = vadd.f32 %v933, %v938
    %v940 = vtanh.pop %v939
    %942 = vrot.lane.b32.xlu0 %v940, 32
    %v943 = vpop.permute.xlu0 %942
    %v945 = vmul.f32 %v927, %v943
    %947 = vrot.lane.b32.xlu0 %v945, 96
    %v948 = vpop.permute.xlu0 %947
    %950 = vst.msk [vmem:[#allocation3 + $0x18] sm:$0xf] %vm331, %v948
    %v951 = vld [vmem:[#allocation2 + $0x1c] sm:$0xf]
    %v952 = vsel %vm228, %v948, 0
    %954 = vmatprep.subr.mxu0 0.0
    %955 = vmatpush1.msra.mxu0 %v38
    %956 = vmatprep.subr.mxu0 0.0
    %957 = vmatpush1.msra.mxu0 %v39
    %958 = vmatprep.subr.mxu0 0.0
    %959 = vmatpush1.msra.mxu0 0.0
    %960 = vmatprep.subr.mxu0 0.0
    %961 = vmatpush1.msra.mxu0 0.0
    %962 = vmatprep.subr.mxu0 0.0
    %963 = vmatpush1.msra.mxu0 0.0
    %964 = vmatprep.subr.mxu0 0.0
    %965 = vmatpush1.msra.mxu0 0.0
    %966 = vmatprep.subr.mxu0 0.0
    %967 = vmatpush1.msra.mxu0 0.0
    %968 = vmatprep.subr.mxu0 0.0
    %969 = vmatpush1.msra.mxu0 0.0
    %970 = vmatprep.subr.mxu0 0.0
    %971 = vmatpush1.msra.mxu0 0.0
    %972 = vmatprep.subr.mxu0 0.0
    %973 = vmatpush1.msra.mxu0 0.0
    %974 = vmatprep.subr.mxu0 0.0
    %975 = vmatpush1.msra.mxu0 0.0
    %976 = vmatprep.subr.mxu0 0.0
    %977 = vmatpush1.msra.mxu0 0.0
    %978 = vmatprep.subr.mxu0 0.0
    %979 = vmatpush1.msra.mxu0 0.0
    %980 = vmatprep.subr.mxu0 0.0
    %981 = vmatpush1.msra.mxu0 0.0
    %982 = vmatprep.subr.mxu0 0.0
    %983 = vmatpush1.msra.mxu0 0.0
    %984 = vmatprep.subr.mxu0 0.0
    %985 = vmatpush1.msra.mxu0 0.0
    %986 = vmatprep.subr.mxu0 0.0
    %987 = vmatpush1.msra.mxu0 0.0
    %988 = vmatprep.subr.mxu0 0.0
    %989 = vmatpush1.msra.mxu0 0.0
    %990 = vmatprep.subr.mxu0 0.0
    %991 = vmatpush1.msra.mxu0 0.0
    %992 = vmatprep.subr.mxu0 0.0
    %993 = vmatpush1.msra.mxu0 0.0
    %994 = vmatprep.subr.mxu0 0.0
    %995 = vmatpush1.msra.mxu0 0.0
    %996 = vmatprep.subr.mxu0 0.0
    %997 = vmatpush1.msra.mxu0 0.0
    %998 = vmatprep.subr.mxu0 0.0
    %999 = vmatpush1.msra.mxu0 0.0
    %1000 = vmatprep.subr.mxu0 0.0
    %1001 = vmatpush1.msra.mxu0 0.0
    %1002 = vmatprep.subr.mxu0 0.0
    %1003 = vmatpush1.msra.mxu0 0.0
    %1004 = vmatprep.subr.mxu0 0.0
    %1005 = vmatpush1.msra.mxu0 0.0
    %1006 = vmatprep.subr.mxu0 0.0
    %1007 = vmatpush1.msra.mxu0 0.0
    %1008 = vmatprep.subr.mxu0 0.0
    %1009 = vmatpush1.msra.mxu0 0.0
    %1010 = vmatprep.subr.mxu0 0.0
    %1011 = vmatpush1.msra.mxu0 0.0
    %1012 = vmatprep.subr.mxu0 0.0
    %1013 = vmatpush1.msra.mxu0 0.0
    %1014 = vmatprep.subr.mxu0 0.0
    %1015 = vmatpush1.msra.mxu0 0.0
    %1016 = vmatprep.subr.mxu0 0.0
    %1017 = vmatpush1.msra.mxu0 0.0
    %1018 = vmatprep.mubr.f32.mxu0 0.0
    %1019 = vmatmul.mubr.f32.gmra.mrb[0].mxu0 %v952
    %v1020 = vpop.f32.mrb[0].mxu0
    %v1021 = vadd.f32 0.0, %v1020
    %v1022 = vpop.f32.mrb[0].mxu0
    %1023 = vdwg.mxu0
    %v1024 = vadd.f32 %v951, %v1021
    %v1025 = vxor.u32 %v1024, 2147483648
    %v1026 = vmul.f32 %v1025, 1.442695
    %v1027 = vpow.pop %v1026
    %v1028 = vadd.f32 %v1027, 1.0
    %v1029 = vrcp.pop %v1028
    %v1030 = vmul.f32 1.0, %v1029
    %v1031 = vtanh.pop %v1024
    %1033 = vrot.lane.b32.xlu0 %v1030, 112
    %v1034 = vpop.permute.xlu0 %1033
    %v1036 = vmul.f32 %v939, %v1034
    %1038 = vrot.lane.b32.xlu0 %v1031, 80
    %v1039 = vpop.permute.xlu0 %1038
    %v1041 = vmul.f32 %v1030, %v1039
    %v1042 = vadd.f32 %v1036, %v1041
    %v1043 = vtanh.pop %v1042
    %1045 = vrot.lane.b32.xlu0 %v1043, 32
    %v1046 = vpop.permute.xlu0 %1045
    %v1048 = vmul.f32 %v1030, %v1046
    %1050 = vrot.lane.b32.xlu0 %v1048, 96
    %v1051 = vpop.permute.xlu0 %1050
    %1053 = vst.msk [vmem:[#allocation3 + $0x1c] sm:$0xf] %vm331, %v1051
    %1054 = vst.msk [vmem:[#allocation7] sm:$0xf] %vm331, %v1051
    %1055 = vst.msk [vmem:[#allocation8] sm:$0xf] %vm331, %v1042
    %v1056 = vld [vmem:[#allocation3] sm:$0xff]
    %v1057 = vld [vmem:[#allocation3 + $0x8] sm:$0xff]
    %v1058 = vld [vmem:[#allocation3 + $0x10] sm:$0xff]
    %v1059 = vld [vmem:[#allocation3 + $0x18] sm:$0xff]
    %v1060 = vlaneseq
    %v1061 = vshrl.u32 %v1060, 7
    %v1062 = vsub.s32 0, %v1061
    %v1063 = vrot.slane %v43, %v1062
    %v1065 = vsel %vm228, %v1056, 0
    %v1068 = vsel %vm228, %v1057, 0
    %v1071 = vsel %vm228, %v1058, 0
    %v1074 = vsel %vm228, %v1059, 0
    %1076 = vmatprep.subr.mxu0 0.0
    %1077 = vmatpush1.msra.mxu0 %v41
    %1078 = vmatprep.subr.mxu0 0.0
    %1079 = vmatpush1.msra.mxu0 %v42
    %1080 = vmatprep.subr.mxu0 0.0
    %1081 = vmatpush1.msra.mxu0 0.0
    %1082 = vmatprep.subr.mxu0 0.0
    %1083 = vmatpush1.msra.mxu0 0.0
    %1084 = vmatprep.subr.mxu0 0.0
    %1085 = vmatpush1.msra.mxu0 0.0
    %1086 = vmatprep.subr.mxu0 0.0
    %1087 = vmatpush1.msra.mxu0 0.0
    %1088 = vmatprep.subr.mxu0 0.0
    %1089 = vmatpush1.msra.mxu0 0.0
    %1090 = vmatprep.subr.mxu0 0.0
    %1091 = vmatpush1.msra.mxu0 0.0
    %1092 = vmatprep.subr.mxu0 0.0
    %1093 = vmatpush1.msra.mxu0 0.0
    %1094 = vmatprep.subr.mxu0 0.0
    %1095 = vmatpush1.msra.mxu0 0.0
    %1096 = vmatprep.subr.mxu0 0.0
    %1097 = vmatpush1.msra.mxu0 0.0
    %1098 = vmatprep.subr.mxu0 0.0
    %1099 = vmatpush1.msra.mxu0 0.0
    %1100 = vmatprep.subr.mxu0 0.0
    %1101 = vmatpush1.msra.mxu0 0.0
    %1102 = vmatprep.subr.mxu0 0.0
    %1103 = vmatpush1.msra.mxu0 0.0
    %1104 = vmatprep.subr.mxu0 0.0
    %1105 = vmatpush1.msra.mxu0 0.0
    %1106 = vmatprep.subr.mxu0 0.0
    %1107 = vmatpush1.msra.mxu0 0.0
    %1108 = vmatprep.subr.mxu0 0.0
    %1109 = vmatpush1.msra.mxu0 0.0
    %1110 = vmatprep.subr.mxu0 0.0
    %1111 = vmatpush1.msra.mxu0 0.0
    %1112 = vmatprep.subr.mxu0 0.0
    %1113 = vmatpush1.msra.mxu0 0.0
    %1114 = vmatprep.subr.mxu0 0.0
    %1115 = vmatpush1.msra.mxu0 0.0
    %1116 = vmatprep.subr.mxu0 0.0
    %1117 = vmatpush1.msra.mxu0 0.0
    %1118 = vmatprep.subr.mxu0 0.0
    %1119 = vmatpush1.msra.mxu0 0.0
    %1120 = vmatprep.subr.mxu0 0.0
    %1121 = vmatpush1.msra.mxu0 0.0
    %1122 = vmatprep.subr.mxu0 0.0
    %1123 = vmatpush1.msra.mxu0 0.0
    %1124 = vmatprep.subr.mxu0 0.0
    %1125 = vmatpush1.msra.mxu0 0.0
    %1126 = vmatprep.subr.mxu0 0.0
    %1127 = vmatpush1.msra.mxu0 0.0
    %1128 = vmatprep.subr.mxu0 0.0
    %1129 = vmatpush1.msra.mxu0 0.0
    %1130 = vmatprep.subr.mxu0 0.0
    %1131 = vmatpush1.msra.mxu0 0.0
    %1132 = vmatprep.subr.mxu0 0.0
    %1133 = vmatpush1.msra.mxu0 0.0
    %1134 = vmatprep.subr.mxu0 0.0
    %1135 = vmatpush1.msra.mxu0 0.0
    %1136 = vmatprep.subr.mxu0 0.0
    %1137 = vmatpush1.msra.mxu0 0.0
    %1138 = vmatprep.subr.mxu0 0.0
    %1139 = vmatpush1.msra.mxu0 0.0
    %1140 = vmatprep.mubr.f32.mxu0 0.0
    %1141 = vmatmul.mubr.f32.gmra.mrb[0].mxu0 %v1065
    %v1142 = vpop.f32.mrb[0].mxu0
    %v1143 = vadd.f32 %v1063, %v1142
    %v1144 = vpop.f32.mrb[0].mxu0
    %1145 = vmatprep.mubr.f32.mxu0 0.0
    %1146 = vmatmul.mubr.f32.gmra.mrb[0].mxu0 %v1068
    %v1147 = vpop.f32.mrb[0].mxu0
    %v1148 = vadd.f32 %v1063, %v1147
    %v1149 = vpop.f32.mrb[0].mxu0
    %1150 = vmatprep.mubr.f32.mxu0 0.0
    %1151 = vmatmul.mubr.f32.gmra.mrb[0].mxu0 %v1071
    %v1152 = vpop.f32.mrb[0].mxu0
    %v1153 = vadd.f32 %v1063, %v1152
    %v1154 = vpop.f32.mrb[0].mxu0
    %1155 = vmatprep.mubr.f32.mxu0 0.0
    %1156 = vmatmul.mubr.f32.gmra.mrb[0].mxu0 %v1074
    %v1157 = vpop.f32.mrb[0].mxu0
    %v1158 = vadd.f32 %v1063, %v1157
    %v1159 = vpop.f32.mrb[0].mxu0
    %1160 = vdwg.mxu0
    %vm1161 = vcmask 15360
    %1162 = vst.msk [vmem:[%s4] sm:$0xff] %vm1161, %v1143
    %1163 = vst.msk [vmem:[%s4 + $0x8] sm:$0xff] %vm1161, %v1148
    %1164 = vst.msk [vmem:[%s4 + $0x10] sm:$0xff] %vm1161, %v1153
    %1165 = vst.msk [vmem:[%s4 + $0x18] sm:$0xff] %vm1161, %v1158
    // Predicated region
    $region22: #{meta_decoder_rnn_sequence.1} parent=1 // pred_check
      _
    $region23: #{meta_decoder_rnn_sequence.1} parent=1 // pred_check_branch
      %1167 = sbr.rel (0) target = $region25
    $region24: #{meta_decoder_rnn_sequence.1} parent=1 // pred_region
      _
    $region25: #{meta_decoder_rnn_sequence.1} parent=1 // pred_fallthru
      _
    // Predicated region
    $region26: #{meta_decoder_rnn_sequence.1} parent=1 // pred_check
      _
    $region27: #{meta_decoder_rnn_sequence.1} parent=1 // pred_check_branch
      %1169 = sbr.rel (0) target = $region29
    $region28: #{meta_decoder_rnn_sequence.1} parent=1 // pred_region
      %s1171 = ssub.s32 64, 64
      %1172 = vsyncadd [#allocation6], %s1171
      %s1174 = sshll.u32 [#allocation7], 4
      %s1175 = int_to_ptr.vmem [resolvable:$true] %s1174
      %1177 = dma.vmem_to_hbm [thread:$0]  %s1175, 64, %s5, [#allocation6]
    $region29: #{meta_decoder_rnn_sequence.1} parent=1 // pred_fallthru
      _
    // Predicated region
    $region30: #{meta_decoder_rnn_sequence.1} parent=1 // pred_check
      _
    $region31: #{meta_decoder_rnn_sequence.1} parent=1 // pred_check_branch
      %1179 = sbr.rel (0) target = $region33
    $region32: #{meta_decoder_rnn_sequence.1} parent=1 // pred_region
      %s1181 = ssub.s32 64, 64
      %1182 = vsyncadd [#allocation9], %s1181
      %s1184 = sshll.u32 [#allocation8], 4
      %s1185 = int_to_ptr.vmem [resolvable:$true] %s1184
      %1187 = dma.vmem_to_hbm [thread:$0]  %s1185, 64, %s6, [#allocation9]
    $region33: #{meta_decoder_rnn_sequence.1} parent=1 // pred_fallthru
      _
    // Predicated region
    $region34: #{meta_decoder_rnn_sequence.1} parent=1 // pred_check
      _
    $region35: #{meta_decoder_rnn_sequence.1} parent=1 // pred_check_branch
      %1189 = sbr.rel (0) target = $region37
    $region36: #{meta_decoder_rnn_sequence.1} parent=1 // pred_region
      _
    $region37: #{meta_decoder_rnn_sequence.1} parent=1 // pred_fallthru
      _
    // Predicated region
    $region38: #{meta_decoder_rnn_sequence.1} parent=1 // pred_check
      _
    $region39: #{meta_decoder_rnn_sequence.1} parent=1 // pred_check_branch
      %1191 = sbr.rel (0) target = $region41
    $region40: #{meta_decoder_rnn_sequence.1} parent=1 // pred_region
      %1192 = dma.done [#allocation6], 64
    $region41: #{meta_decoder_rnn_sequence.1} parent=1 // pred_fallthru
      _
    // Predicated region
    $region42: #{meta_decoder_rnn_sequence.1} parent=1 // pred_check
      _
    $region43: #{meta_decoder_rnn_sequence.1} parent=1 // pred_check_branch
      %1194 = sbr.rel (0) target = $region45
    $region44: #{meta_decoder_rnn_sequence.1} parent=1 // pred_region
      %1195 = dma.done [#allocation9], 64
    $region45: #{meta_decoder_rnn_sequence.1} parent=1 // pred_fallthru
      _
    %1196 = vsyncpa [#allocation5], 1
    %1197 = vsyncpa [#allocation6], 1
    %1198 = vsyncpa [#allocation9], 1

</llo_original>
